<compile_context>
chip_gen: v5e
topology: v5e:2x2
jax: 0.10.0
libtpu: 0.0.40
codegen_flags: <defaults>
</compile_context>

<pallas_src>
import functools
import math

import jax
import jax.numpy as jnp
from jax.experimental import pallas as pl
from jax.experimental.pallas import tpu as pltpu


def _vmem_limit_bytes():
    # Generation-aware scoped-VMEM limit: ~70% of physical, capped at 96 MiB
    # (v5e/v6e have 128 MiB of VMEM per core, v7x only 64 MiB).
    try:
        cap = int(pltpu.get_tpu_info().vmem_capacity_bytes)
    except Exception:
        cap = 64 * 1024 * 1024
    return max(32 * 1024 * 1024, min(int(cap * 0.7), 96 * 1024 * 1024))


_VMEM_LIMIT = _vmem_limit_bytes()


def _pick_row_tile(H, scale_lcm):
    for t in (16, 8, 4, 2, 1):
        if t % scale_lcm == 0 and H % t == 0:
            return t
    assert H % scale_lcm == 0, "feature height must be divisible by every upsample factor"
    return scale_lcm


def _pick_tile_n(n):
    assert n % 128 == 0, "flattened pixel count (b*h*w) must be a multiple of 128"
    t = min(n, 2048)
    t -= t % 128
    while t > 128:
        if n % t == 0 and n // t >= 2:   # keep >= 2 grid steps (v7x has 2 TCs)
            return t
        t -= 128
    return 128


# ----------------------------------------------------------------------------
# Kernel 1: per-stage depthwise 3x3 conv (stride 1, pad 1) of the nearest-
#   upsampled stage.  Row-tiled: grid (B, H//TH).  The stage input is kept at
#   its LOW H resolution in HBM; the index_map fetches the THf low-res rows
#   (+1-row halos) and the kernel repeats them `scale` times along H.  The W
#   halo is handled with pltpu.roll + edge masks.  bf16 in / bf16 out, f32 taps.
# ----------------------------------------------------------------------------
def _dwconv3x3_kernel(up_ref, xc_ref, dn_ref, w_ref, b_ref, o_ref, *, THf, scale, W):
    TH = THf * scale
    i = pl.program_id(1)
    nT = pl.num_programs(1)
    f32 = jnp.float32

    # halo rows, zeroed at the image top / bottom (== the conv's zero padding)
    up = up_ref[0]
    up = up * (i > 0).astype(up.dtype)                        # (1, W, C)
    dn = dn_ref[0]
    dn = dn * (i < nT - 1).astype(dn.dtype)                   # (1, W, C)
    xc = xc_ref[0]                                            # (THf, W, C)
    if scale > 1:
        # fused nearest upsample along H (leading-axis repeat: no relayout)
        xc = jnp.repeat(xc, scale, axis=0)                    # (TH, W, C)
    xt = jnp.concatenate([up, xc, dn], axis=0)                # (TH+2, W, C) bf16
    C = xt.shape[-1]
    w = w_ref[...]                                            # (3, 3, C) f32

    # W-direction zero padding: masks for the wrapped-around rolled columns
    col = jax.lax.broadcasted_iota(jnp.int32, (1, W, 1), 1)
    m_l = (col > 0).astype(f32)                               # left neighbor valid
    m_r = (col < W - 1).astype(f32)                           # right neighbor valid

    acc = jnp.zeros((TH, W, C), f32)
    for dh in range(3):
        rows = xt[dh:dh + TH].astype(f32)                     # (TH, W, C) slab slice
        # neighbor columns via sublane rotation (XLU slot) — no VMEM copies
        left = pltpu.roll(rows, shift=1, axis=1) * m_l        # x[w-1]
        right = pltpu.roll(rows, shift=W - 1, axis=1) * m_r   # x[w+1]
        acc = acc + left * w[dh, 0] + rows * w[dh, 1] + right * w[dh, 2]
    acc = acc + b_ref[...]                                    # (1, C) broadcast
    o_ref[0] = acc.astype(o_ref.dtype)


def depthwise_conv3x3_stage(x_s, w_s, b_s, *, scale, TH, H, W):
    """x_s: (B, Hs, W, Cs) bf16 (W already at full res, H at low res);
    returns the depthwise conv of the nearest-upsampled stage: (B, H, W, Cs) bf16."""
    B, Hs, Wx, Cs = x_s.shape
    assert Wx == W and Hs * scale == H and TH % scale == 0 and H % TH == 0
    THf = TH // scale
    nT = H // TH
    kern = functools.partial(_dwconv3x3_kernel, THf=THf, scale=scale, W=W)
    return pl.pallas_call(
        kern,
        out_shape=jax.ShapeDtypeStruct((B, H, W, Cs), jnp.bfloat16),
        grid=(B, nT),
        in_specs=[
            # low-res halo row above the tile (block size 1 -> block idx == row idx)
            pl.BlockSpec((1, 1, W, Cs),
                         lambda b_, i: (b_, jnp.maximum(i * THf - 1, 0), 0, 0)),
            # the THf low-res rows covering the TH full-res output rows
            pl.BlockSpec((1, THf, W, Cs), lambda b_, i: (b_, i, 0, 0)),
            # low-res halo row below the tile
            pl.BlockSpec((1, 1, W, Cs),
                         lambda b_, i: (b_, jnp.minimum((i + 1) * THf, Hs - 1), 0, 0)),
            pl.BlockSpec((3, 3, Cs), lambda b_, i: (0, 0, 0)),
            pl.BlockSpec((1, Cs), lambda b_, i: (0, 0)),
        ],
        out_specs=pl.BlockSpec((1, TH, W, Cs), lambda b_, i: (b_, i, 0, 0)),
        compiler_params=pltpu.CompilerParams(
            dimension_semantics=("parallel", "parallel"),
            vmem_limit_bytes=_VMEM_LIMIT),
    )(x_s, x_s, x_s, w_s, b_s.reshape(1, Cs))


# ----------------------------------------------------------------------------
# Kernel 2: fused head
#   pointwise conv (+folded BN, contraction split over the 4 stage groups)
#   -> 1x1 conv (+folded BN, ReLU) -> 1x1 conv (+bias) -> LayerNorm(D)
#   -> l2_normalize -> prototype scores -> max over prototypes -> LayerNorm(K).
#   Weights resident in VMEM; bf16 MXU operands, f32 accumulate; output written
#   transposed as lane-dense (K, tile_n) blocks of a (K, N) array.
# ----------------------------------------------------------------------------
def _head_kernel(d1_ref, d2_ref, d3_ref, d4_ref,
                 w1_ref, w2_ref, w3_ref, w4_ref,
                 s1_ref, t1_ref, pj1_w_ref, s2_ref, t2_ref,
                 pj2_w_ref, b3_ref, fg_ref, fb_ref, pT_ref, mg_ref, mb_ref,
                 o_ref, *, K, M):
    eps = 1e-5
    f32 = jnp.float32
    bf = jnp.bfloat16
    # pointwise conv + folded BatchNorm (channel-group split contraction)
    y = jnp.dot(d1_ref[...], w1_ref[...], preferred_element_type=f32)
    y = y + jnp.dot(d2_ref[...], w2_ref[...], preferred_element_type=f32)
    y = y + jnp.dot(d3_ref[...], w3_ref[...], preferred_element_type=f32)
    y = y + jnp.dot(d4_ref[...], w4_ref[...], preferred_element_type=f32)
    y = y * s1_ref[...] + t1_ref[...]
    # proj conv1 + folded BN + ReLU
    y = jnp.dot(y.astype(bf), pj1_w_ref[...], preferred_element_type=f32)
    y = jnp.maximum(y * s2_ref[...] + t2_ref[...], 0.0)
    # proj conv2 + bias
    y = jnp.dot(y.astype(bf), pj2_w_ref[...], preferred_element_type=f32)
    y = y + b3_ref[...]
    # feat_norm (LayerNorm over channels, f32)
    mu = jnp.mean(y, axis=-1, keepdims=True)
    yc = y - mu
    var = jnp.mean(yc * yc, axis=-1, keepdims=True)
    yn = yc * jax.lax.rsqrt(var + eps)
    yn = yn * fg_ref[...] + fb_ref[...]
    # l2_normalize over channels (torch F.normalize eps=1e-12); rsqrt -> EUP slot
    ssq = jnp.sum(yn * yn, axis=-1, keepdims=True)
    yn = yn * jax.lax.rsqrt(jnp.maximum(ssq, 1e-24))
    yn16 = yn.astype(bf)
    # scores_t[k*M + m, n] = <protos[k, m, :], _c[n, :]>; contract the last dims
    # of the bf16 operands directly — no materialized f32 transpose in VMEM.
    scores_t = jax.lax.dot_general(pT_ref[...], yn16,
                                   (((1,), (1,)), ((), ())),
                                   preferred_element_type=f32)      # (K*M, tn)
    tn = scores_t.shape[-1]
    # out_seg[k, n] = max_m masks[n, m, k]  (sublane reduction; M is tile-aligned)
    seg = jnp.max(scores_t.reshape(K, M, tn), axis=1)               # (K, tn)
    # mask_norm (LayerNorm over the K classes)
    mu2 = jnp.mean(seg, axis=0, keepdims=True)
    sc = seg - mu2
    var2 = jnp.mean(sc * sc, axis=0, keepdims=True)
    segn = sc * jax.lax.rsqrt(var2 + eps)
    o_ref[...] = segn * mg_ref[...] + mb_ref[...]                   # (K, tn) lane-dense


def fused_head(ds, pw_ws, s1, t1, pj1_w, s2, t2, pj2_w, b3,
               feat_gamma, feat_beta, protos_l2, mask_gamma, mask_beta,
               *, tile_n=None):
    assert len(ds) == 4 and len(pw_ws) == 4
    N = ds[0].shape[0]
    Cout = pj1_w.shape[0]
    K, M, D = protos_l2.shape
    assert D == Cout
    tn = _pick_tile_n(N) if tile_n is None else tile_n
    f32 = jnp.float32
    bf = jnp.bfloat16
    row = lambda v: v.reshape(1, -1).astype(f32)

    # pad the per-class prototype count to a sublane multiple; duplicated rows
    # do not change the per-class max and keep reshape(K, M, tn) tile-aligned.
    M_pad = ((M + 7) // 8) * 8
    if M_pad != M:
        pad = jnp.broadcast_to(protos_l2[:, -1:, :], (K, M_pad - M, D))
        protos_l2 = jnp.concatenate([protos_l2, pad], axis=1)
    pT = protos_l2.reshape(K * M_pad, D).astype(bf)                 # k-major rows

    kern = functools.partial(_head_kernel, K=K, M=M_pad)
    const2 = lambda i: (0, 0)
    in_specs = (
        [pl.BlockSpec((tn, d.shape[1]), lambda i: (i, 0)) for d in ds]
        + [pl.BlockSpec(w.shape, const2) for w in pw_ws]
        + [pl.BlockSpec((1, Cout), const2),           # s1
           pl.BlockSpec((1, Cout), const2),           # t1
           pl.BlockSpec((Cout, Cout), const2),        # pj1_w
           pl.BlockSpec((1, Cout), const2),           # s2
           pl.BlockSpec((1, Cout), const2),           # t2
           pl.BlockSpec((Cout, Cout), const2),        # pj2_w
           pl.BlockSpec((1, Cout), const2),           # b3
           pl.BlockSpec((1, Cout), const2),           # feat_gamma
           pl.BlockSpec((1, Cout), const2),           # feat_beta
           pl.BlockSpec((K * M_pad, Cout), const2),   # prototypes
           pl.BlockSpec((K, 1), const2),              # mask_gamma
           pl.BlockSpec((K, 1), const2)])             # mask_beta
    # TODO(synk): on v7x, pipeline_mode=pl.Buffered(1) on the constant weight
    # specs would free a few MiB of VMEM headroom; left at default buffering.
    return pl.pallas_call(
        kern,
        out_shape=jax.ShapeDtypeStruct((K, N), f32),
        grid=(N // tn,),
        in_specs=in_specs,
        out_specs=pl.BlockSpec((K, tn), lambda i: (0, i)),
        compiler_params=pltpu.CompilerParams(
            dimension_semantics=("parallel",),
            vmem_limit_bytes=_VMEM_LIMIT),
    )(*[d.astype(bf) for d in ds], *[w.astype(bf) for w in pw_ws],
      row(s1), row(t1), pj1_w.astype(bf), row(s2), row(t2),
      pj2_w.astype(bf), row(b3), row(feat_gamma), row(feat_beta),
      pT, mask_gamma.reshape(K, 1).astype(f32), mask_beta.reshape(K, 1).astype(f32))


# ----------------------------------------------------------------------------
# Parameter construction (deterministic, fresh-module style init)
# ----------------------------------------------------------------------------
def init_params(key, in_channels, out_channels, num_classes, num_prototype):
    ks = jax.random.split(key, 6)
    f32 = jnp.float32
    p = {}
    # DepthwiseSeparableConv = depthwise 3x3 (groups=C) + pointwise 1x1
    p["dw_w"] = jax.random.normal(ks[0], (3, 3, in_channels), f32) * 0.05
    p["dw_b"] = jnp.zeros((in_channels,), f32)
    p["pw_w"] = jax.random.normal(ks[1], (in_channels, out_channels), f32) / jnp.sqrt(in_channels)
    p["pw_b"] = jnp.zeros((out_channels,), f32)
    # BatchNorm2d(out_channels) — fresh eval stats
    p["bn1_gamma"] = jnp.ones((out_channels,), f32)
    p["bn1_beta"] = jnp.zeros((out_channels,), f32)
    p["bn1_mean"] = jnp.zeros((out_channels,), f32)
    p["bn1_var"] = jnp.ones((out_channels,), f32)
    # ProjectionHead2D: Conv1x1 -> BN -> ReLU -> Conv1x1   (assumed structure)
    p["pj1_w"] = jax.random.normal(ks[2], (out_channels, out_channels), f32) / jnp.sqrt(out_channels)
    p["pj1_b"] = jnp.zeros((out_channels,), f32)
    p["pjbn_gamma"] = jnp.ones((out_channels,), f32)
    p["pjbn_beta"] = jnp.zeros((out_channels,), f32)
    p["pjbn_mean"] = jnp.zeros((out_channels,), f32)
    p["pjbn_var"] = jnp.ones((out_channels,), f32)
    p["pj2_w"] = jax.random.normal(ks[3], (out_channels, out_channels), f32) / jnp.sqrt(out_channels)
    p["pj2_b"] = jnp.zeros((out_channels,), f32)
    # feat_norm / mask_norm LayerNorms (fresh init)
    p["feat_gamma"] = jnp.ones((out_channels,), f32)
    p["feat_beta"] = jnp.zeros((out_channels,), f32)
    p["mask_gamma"] = jnp.ones((num_classes,), f32)
    p["mask_beta"] = jnp.zeros((num_classes,), f32)
    # prototypes ~ trunc_normal(std=0.02), shape (K, M, out_channels)
    p["prototypes"] = 0.02 * jax.random.truncated_normal(
        ks[4], -2.0, 2.0, (num_classes, num_prototype, out_channels), f32)
    return p


# ----------------------------------------------------------------------------
# Forward (inference path of Extra.forward: p=False, extra=False, gt=None)
# ----------------------------------------------------------------------------
def extra_forward(params, backbone_feats, num_classes):
    # TODO(synk): `backbone` and `self.dec` (DecoderBranches) are external modules
    # not defined in the reference file; only the prototype/segmentation head
    # (cls_head -> proj_head -> prototype classification) is implemented here.
    xs = [backbone_feats[i] for i in (1, 2, 3, 4)]
    B, H, W, _ = xs[0].shape
    scales_h, scales_w = [], []
    for f in xs:
        fh, fw = int(f.shape[1]), int(f.shape[2])
        assert H % fh == 0 and W % fw == 0, "nearest upsample factors must be integers"
        scales_h.append(H // fh)
        scales_w.append(W // fw)
    lcm_h = 1
    for s in scales_h:
        lcm_h = math.lcm(lcm_h, s)
    TH = _pick_row_tile(H, lcm_h)

    chs = [int(f.shape[-1]) for f in xs]
    offs = [0]
    for c in chs:
        offs.append(offs[-1] + c)

    eps = 1e-5
    bf = jnp.bfloat16

    # cls_head depthwise 3x3 conv, computed per backbone stage (a depthwise conv
    # decomposes over channels), so the full-res channel concat never exists in
    # HBM.  Dropout2d in eval mode is the identity.
    d_list = []
    for s in range(4):
        c0, c1 = offs[s], offs[s + 1]
        x_in = xs[s].astype(bf)
        if scales_w[s] > 1:
            # nearest upsample along W only (bf16, 1/scale_h of full-res bytes);
            # the H upsample is fused into the conv kernel's index_map.
            x_in = jnp.repeat(x_in, scales_w[s], axis=2)
        d = depthwise_conv3x3_stage(
            x_in, params["dw_w"][:, :, c0:c1], params["dw_b"][c0:c1],
            scale=scales_h[s], TH=TH, H=H, W=W)
        d_list.append(d.reshape(B * H * W, c1 - c0))          # contiguous reshape

    # fold BatchNorms into scale/shift (eval mode)
    s1 = params["bn1_gamma"] / jnp.sqrt(params["bn1_var"] + eps)
    t1 = (params["pw_b"] - params["bn1_mean"]) * s1 + params["bn1_beta"]
    s2 = params["pjbn_gamma"] / jnp.sqrt(params["pjbn_var"] + eps)
    t2 = (params["pj1_b"] - params["pjbn_mean"]) * s2 + params["pjbn_beta"]

    # self.prototypes.data.copy_(l2_normalize(self.prototypes))
    protos = params["prototypes"]
    protos = protos / jnp.maximum(
        jnp.sqrt(jnp.sum(protos * protos, axis=-1, keepdims=True)), 1e-12)

    pw_ws = [params["pw_w"][offs[s]:offs[s + 1]] for s in range(4)]

    out_kn = fused_head(d_list, pw_ws, s1, t1, params["pj1_w"], s2, t2,
                        params["pj2_w"], params["pj2_b"],
                        params["feat_gamma"], params["feat_beta"],
                        protos, params["mask_gamma"], params["mask_beta"])

    # (k, b*h*w) -> (b, k, h, w)   (tiny tensor; XLA transpose)
    out_seg = out_kn.reshape(num_classes, B, H, W).transpose(1, 0, 2, 3)
    return out_seg


# ----------------------------------------------------------------------------
if __name__ == "__main__":
    key = jax.random.PRNGKey(0)
    B = 2
    num_classes, num_prototype = 4, 8
    out_channels = 128                       # scaled down from 512 for the small test
    chs = [8, 16, 32, 64, 128]               # backbone channels (scaled down)
    spatials = [32, 16, 8, 4, 2]             # backbone spatial sizes per stage
    in_channels = sum(chs[1:])               # 240 (cls_head input channels)

    k_feat, k_par = jax.random.split(key)
    # Synthetic backbone outputs (the backbone is an external module passed to
    # __init__); layout NHWC.
    fkeys = jax.random.split(k_feat, 5)
    backbone_feats = [
        jax.random.normal(fkeys[i], (B, spatials[i], spatials[i], chs[i]), jnp.float32)
        for i in range(5)
    ]

    params = init_params(k_par, in_channels, out_channels, num_classes, num_prototype)

    out_seg = extra_forward(params, backbone_feats, num_classes)
    out_seg = jax.block_until_ready(out_seg)

    assert out_seg.shape == (B, num_classes, spatials[1], spatials[1])
    assert bool(jnp.all(jnp.isfinite(out_seg)))
    print("KERNEL_OK")
</pallas_src>

<mosaic_0001>
module attributes {stable_mosaic.version = 11 : i64} {
  func.func @_dwconv3x3_kernel(%arg0: i32, %arg1: i32, %arg2: memref<1x1x16x16xbf16, #tpu.memory_space<vmem>>, %arg3: memref<1x16x16x16xbf16, #tpu.memory_space<vmem>>, %arg4: memref<1x1x16x16xbf16, #tpu.memory_space<vmem>>, %arg5: memref<3x3x16xf32, #tpu.memory_space<vmem>>, %arg6: memref<1x16xf32, #tpu.memory_space<vmem>>, %arg7: memref<1x16x16x16xbf16, #tpu.memory_space<vmem>>) attributes {dimension_semantics = [#tpu.dimension_semantics<parallel>, #tpu.dimension_semantics<parallel>], iteration_bounds = array<i64: 2, 1>, scalar_prefetch = 0 : i64, scratch_operands = 0 : i64, tpu.core_type = #tpu.core_type<tc>, window_params = [{transform_indices = @transform_0, window_bounds = array<i64: 1, 1, 16, 16>}, {transform_indices = @transform_1, window_bounds = array<i64: 1, 16, 16, 16>}, {transform_indices = @transform_2, window_bounds = array<i64: 1, 1, 16, 16>}, {pipeline_mode = #tpu.pipeline_mode<synchronous>, transform_indices = @transform_3, window_bounds = array<i64: 3, 3, 16>}, {pipeline_mode = #tpu.pipeline_mode<synchronous>, transform_indices = @transform_4, window_bounds = array<i64: 1, 16>}, {transform_indices = @transform_5, window_bounds = array<i64: 1, 16, 16, 16>}]} {
    %c0 = arith.constant 0 : index
    %c0_0 = arith.constant 0 : index
    %c0_1 = arith.constant 0 : index
    %c0_2 = arith.constant 0 : index
    %0 = vector.load %arg2[%c0, %c0_0, %c0_1, %c0_2] : memref<1x1x16x16xbf16, #tpu.memory_space<vmem>>, vector<1x1x16x16xbf16>
    %1 = vector.shape_cast %0 : vector<1x1x16x16xbf16> to vector<1x16x16xbf16>
    %c0_i32 = arith.constant 0 : i32
    %2 = arith.cmpi sgt, %arg1, %c0_i32 : i32
    %3 = arith.extui %2 : i1 to i32
    %4 = arith.sitofp %3 : i32 to f32
    %5 = arith.truncf %4 : f32 to bf16
    %6 = vector.broadcast %5 : bf16 to vector<1x16x16xbf16>
    %7 = arith.mulf %1, %6 : vector<1x16x16xbf16>
    %c0_3 = arith.constant 0 : index
    %c0_4 = arith.constant 0 : index
    %c0_5 = arith.constant 0 : index
    %c0_6 = arith.constant 0 : index
    %8 = vector.load %arg4[%c0_3, %c0_4, %c0_5, %c0_6] : memref<1x1x16x16xbf16, #tpu.memory_space<vmem>>, vector<1x1x16x16xbf16>
    %9 = vector.shape_cast %8 : vector<1x1x16x16xbf16> to vector<1x16x16xbf16>
    %c0_i32_7 = arith.constant 0 : i32
    %10 = arith.cmpi slt, %arg1, %c0_i32_7 : i32
    %11 = arith.extui %10 : i1 to i32
    %12 = arith.sitofp %11 : i32 to f32
    %13 = arith.truncf %12 : f32 to bf16
    %14 = vector.broadcast %13 : bf16 to vector<1x16x16xbf16>
    %15 = arith.mulf %9, %14 : vector<1x16x16xbf16>
    %c0_8 = arith.constant 0 : index
    %c0_9 = arith.constant 0 : index
    %c0_10 = arith.constant 0 : index
    %c0_11 = arith.constant 0 : index
    %16 = vector.load %arg3[%c0_8, %c0_9, %c0_10, %c0_11] : memref<1x16x16x16xbf16, #tpu.memory_space<vmem>>, vector<1x16x16x16xbf16>
    %17 = vector.shape_cast %16 : vector<1x16x16x16xbf16> to vector<16x16x16xbf16>
    %18 = tpu.concatenate %7, %17, %15 in 0 : vector<1x16x16xbf16>, vector<16x16x16xbf16>, vector<1x16x16xbf16> -> vector<18x16x16xbf16>
    %c0_12 = arith.constant 0 : index
    %c0_13 = arith.constant 0 : index
    %c0_14 = arith.constant 0 : index
    %19 = vector.load %arg5[%c0_12, %c0_13, %c0_14] : memref<3x3x16xf32, #tpu.memory_space<vmem>>, vector<3x3x16xf32>
    %20 = tpu.iota {dimensions = array<i32: 1>} : vector<1x16x1xi32>
    %c0_i32_15 = arith.constant 0 : i32
    %21 = vector.broadcast %c0_i32_15 : i32 to vector<1x16x1xi32>
    %22 = arith.cmpi sgt, %20, %21 : vector<1x16x1xi32>
    %23 = arith.extui %22 : vector<1x16x1xi1> to vector<1x16x1xi32>
    %24 = arith.sitofp %23 : vector<1x16x1xi32> to vector<1x16x1xf32>
    %c15_i32 = arith.constant 15 : i32
    %25 = vector.broadcast %c15_i32 : i32 to vector<1x16x1xi32>
    %26 = arith.cmpi slt, %20, %25 : vector<1x16x1xi32>
    %27 = arith.extui %26 : vector<1x16x1xi1> to vector<1x16x1xi32>
    %28 = arith.sitofp %27 : vector<1x16x1xi32> to vector<1x16x1xf32>
    %cst = arith.constant 0.000000e+00 : f32
    %29 = vector.broadcast %cst : f32 to vector<16x16x16xf32>
    %30 = vector.extract_strided_slice %18 {offsets = [0, 0, 0], sizes = [16, 16, 16], strides = [1, 1, 1]} : vector<18x16x16xbf16> to vector<16x16x16xbf16>
    %31 = arith.extf %30 : vector<16x16x16xbf16> to vector<16x16x16xf32>
    %c1_i32 = arith.constant 1 : i32
    %32 = tpu.dynamic_rotate %31 by %c1_i32 dim 1 : vector<16x16x16xf32>, i32 -> vector<16x16x16xf32>
    %33 = vector.broadcast %24 : vector<1x16x1xf32> to vector<16x16x16xf32>
    %34 = arith.mulf %32, %33 : vector<16x16x16xf32>
    %c15_i32_16 = arith.constant 15 : i32
    %35 = tpu.dynamic_rotate %31 by %c15_i32_16 dim 1 : vector<16x16x16xf32>, i32 -> vector<16x16x16xf32>
    %36 = vector.broadcast %28 : vector<1x16x1xf32> to vector<16x16x16xf32>
    %37 = arith.mulf %35, %36 : vector<16x16x16xf32>
    %38 = vector.extract_strided_slice %19 {offsets = [0, 0, 0], sizes = [1, 1, 16], strides = [1, 1, 1]} : vector<3x3x16xf32> to vector<1x1x16xf32>
    %39 = vector.shape_cast %38 : vector<1x1x16xf32> to vector<16xf32>
    %40 = vector.shape_cast %39 : vector<16xf32> to vector<1x1x16xf32>
    %41 = vector.broadcast %40 : vector<1x1x16xf32> to vector<16x16x16xf32>
    %42 = arith.mulf %34, %41 : vector<16x16x16xf32>
    %43 = arith.addf %29, %42 : vector<16x16x16xf32>
    %44 = vector.extract_strided_slice %19 {offsets = [0, 1, 0], sizes = [1, 1, 16], strides = [1, 1, 1]} : vector<3x3x16xf32> to vector<1x1x16xf32>
    %45 = vector.shape_cast %44 : vector<1x1x16xf32> to vector<16xf32>
    %46 = vector.shape_cast %45 : vector<16xf32> to vector<1x1x16xf32>
    %47 = vector.broadcast %46 : vector<1x1x16xf32> to vector<16x16x16xf32>
    %48 = arith.mulf %31, %47 : vector<16x16x16xf32>
    %49 = arith.addf %43, %48 : vector<16x16x16xf32>
    %50 = vector.extract_strided_slice %19 {offsets = [0, 2, 0], sizes = [1, 1, 16], strides = [1, 1, 1]} : vector<3x3x16xf32> to vector<1x1x16xf32>
    %51 = vector.shape_cast %50 : vector<1x1x16xf32> to vector<16xf32>
    %52 = vector.shape_cast %51 : vector<16xf32> to vector<1x1x16xf32>
    %53 = vector.broadcast %52 : vector<1x1x16xf32> to vector<16x16x16xf32>
    %54 = arith.mulf %37, %53 : vector<16x16x16xf32>
    %55 = arith.addf %49, %54 : vector<16x16x16xf32>
    %56 = vector.extract_strided_slice %18 {offsets = [1, 0, 0], sizes = [16, 16, 16], strides = [1, 1, 1]} : vector<18x16x16xbf16> to vector<16x16x16xbf16>
    %57 = arith.extf %56 : vector<16x16x16xbf16> to vector<16x16x16xf32>
    %c1_i32_17 = arith.constant 1 : i32
    %58 = tpu.dynamic_rotate %57 by %c1_i32_17 dim 1 : vector<16x16x16xf32>, i32 -> vector<16x16x16xf32>
    %59 = vector.broadcast %24 : vector<1x16x1xf32> to vector<16x16x16xf32>
    %60 = arith.mulf %58, %59 : vector<16x16x16xf32>
    %c15_i32_18 = arith.constant 15 : i32
    %61 = tpu.dynamic_rotate %57 by %c15_i32_18 dim 1 : vector<16x16x16xf32>, i32 -> vector<16x16x16xf32>
    %62 = vector.broadcast %28 : vector<1x16x1xf32> to vector<16x16x16xf32>
    %63 = arith.mulf %61, %62 : vector<16x16x16xf32>
    %64 = vector.extract_strided_slice %19 {offsets = [1, 0, 0], sizes = [1, 1, 16], strides = [1, 1, 1]} : vector<3x3x16xf32> to vector<1x1x16xf32>
    %65 = vector.shape_cast %64 : vector<1x1x16xf32> to vector<16xf32>
    %66 = vector.shape_cast %65 : vector<16xf32> to vector<1x1x16xf32>
    %67 = vector.broadcast %66 : vector<1x1x16xf32> to vector<16x16x16xf32>
    %68 = arith.mulf %60, %67 : vector<16x16x16xf32>
    %69 = arith.addf %55, %68 : vector<16x16x16xf32>
    %70 = vector.extract_strided_slice %19 {offsets = [1, 1, 0], sizes = [1, 1, 16], strides = [1, 1, 1]} : vector<3x3x16xf32> to vector<1x1x16xf32>
    %71 = vector.shape_cast %70 : vector<1x1x16xf32> to vector<16xf32>
    %72 = vector.shape_cast %71 : vector<16xf32> to vector<1x1x16xf32>
    %73 = vector.broadcast %72 : vector<1x1x16xf32> to vector<16x16x16xf32>
    %74 = arith.mulf %57, %73 : vector<16x16x16xf32>
    %75 = arith.addf %69, %74 : vector<16x16x16xf32>
    %76 = vector.extract_strided_slice %19 {offsets = [1, 2, 0], sizes = [1, 1, 16], strides = [1, 1, 1]} : vector<3x3x16xf32> to vector<1x1x16xf32>
    %77 = vector.shape_cast %76 : vector<1x1x16xf32> to vector<16xf32>
    %78 = vector.shape_cast %77 : vector<16xf32> to vector<1x1x16xf32>
    %79 = vector.broadcast %78 : vector<1x1x16xf32> to vector<16x16x16xf32>
    %80 = arith.mulf %63, %79 : vector<16x16x16xf32>
    %81 = arith.addf %75, %80 : vector<16x16x16xf32>
    %82 = vector.extract_strided_slice %18 {offsets = [2, 0, 0], sizes = [16, 16, 16], strides = [1, 1, 1]} : vector<18x16x16xbf16> to vector<16x16x16xbf16>
    %83 = arith.extf %82 : vector<16x16x16xbf16> to vector<16x16x16xf32>
    %c1_i32_19 = arith.constant 1 : i32
    %84 = tpu.dynamic_rotate %83 by %c1_i32_19 dim 1 : vector<16x16x16xf32>, i32 -> vector<16x16x16xf32>
    %85 = vector.broadcast %24 : vector<1x16x1xf32> to vector<16x16x16xf32>
    %86 = arith.mulf %84, %85 : vector<16x16x16xf32>
    %c15_i32_20 = arith.constant 15 : i32
    %87 = tpu.dynamic_rotate %83 by %c15_i32_20 dim 1 : vector<16x16x16xf32>, i32 -> vector<16x16x16xf32>
    %88 = vector.broadcast %28 : vector<1x16x1xf32> to vector<16x16x16xf32>
    %89 = arith.mulf %87, %88 : vector<16x16x16xf32>
    %90 = vector.extract_strided_slice %19 {offsets = [2, 0, 0], sizes = [1, 1, 16], strides = [1, 1, 1]} : vector<3x3x16xf32> to vector<1x1x16xf32>
    %91 = vector.shape_cast %90 : vector<1x1x16xf32> to vector<16xf32>
    %92 = vector.shape_cast %91 : vector<16xf32> to vector<1x1x16xf32>
    %93 = vector.broadcast %92 : vector<1x1x16xf32> to vector<16x16x16xf32>
    %94 = arith.mulf %86, %93 : vector<16x16x16xf32>
    %95 = arith.addf %81, %94 : vector<16x16x16xf32>
    %96 = vector.extract_strided_slice %19 {offsets = [2, 1, 0], sizes = [1, 1, 16], strides = [1, 1, 1]} : vector<3x3x16xf32> to vector<1x1x16xf32>
    %97 = vector.shape_cast %96 : vector<1x1x16xf32> to vector<16xf32>
    %98 = vector.shape_cast %97 : vector<16xf32> to vector<1x1x16xf32>
    %99 = vector.broadcast %98 : vector<1x1x16xf32> to vector<16x16x16xf32>
    %100 = arith.mulf %83, %99 : vector<16x16x16xf32>
    %101 = arith.addf %95, %100 : vector<16x16x16xf32>
    %102 = vector.extract_strided_slice %19 {offsets = [2, 2, 0], sizes = [1, 1, 16], strides = [1, 1, 1]} : vector<3x3x16xf32> to vector<1x1x16xf32>
    %103 = vector.shape_cast %102 : vector<1x1x16xf32> to vector<16xf32>
    %104 = vector.shape_cast %103 : vector<16xf32> to vector<1x1x16xf32>
    %105 = vector.broadcast %104 : vector<1x1x16xf32> to vector<16x16x16xf32>
    %106 = arith.mulf %89, %105 : vector<16x16x16xf32>
    %107 = arith.addf %101, %106 : vector<16x16x16xf32>
    %c0_21 = arith.constant 0 : index
    %c0_22 = arith.constant 0 : index
    %108 = vector.load %arg6[%c0_21, %c0_22] : memref<1x16xf32, #tpu.memory_space<vmem>>, vector<1x16xf32>
    %109 = vector.shape_cast %108 : vector<1x16xf32> to vector<1x1x16xf32>
    %110 = vector.broadcast %109 : vector<1x1x16xf32> to vector<16x16x16xf32>
    %111 = arith.addf %107, %110 : vector<16x16x16xf32>
    %112 = arith.truncf %111 : vector<16x16x16xf32> to vector<16x16x16xbf16>
    %c0_23 = arith.constant 0 : index
    %c0_24 = arith.constant 0 : index
    %c0_25 = arith.constant 0 : index
    %c0_26 = arith.constant 0 : index
    %113 = vector.load %arg7[%c0_23, %c0_24, %c0_25, %c0_26] : memref<1x16x16x16xbf16, #tpu.memory_space<vmem>>, vector<1x16x16x16xbf16>
    %114 = vector.shape_cast %113 : vector<1x16x16x16xbf16> to vector<16x16x16xbf16>
    %115 = vector.shape_cast %112 : vector<16x16x16xbf16> to vector<1x16x16x16xbf16>
    tpu.vector_store %arg7[%c0_23, %c0_24, %c0_25, %c0_26], %115 {strides = array<i32>} : memref<1x16x16x16xbf16, #tpu.memory_space<vmem>>, vector<1x16x16x16xbf16>,
    return
  }
  func.func @transform_0(%arg0: i32, %arg1: i32) -> (i32, i32, i32, i32) {
    %c16_i32 = arith.constant 16 : i32
    %0 = arith.muli %arg1, %c16_i32 : i32
    %c1_i32 = arith.constant 1 : i32
    %1 = arith.subi %0, %c1_i32 : i32
    %c0_i32 = arith.constant 0 : i32
    %2 = arith.maxsi %1, %c0_i32 : i32
    %c0_i32_0 = arith.constant 0 : i32
    %c0_i32_1 = arith.constant 0 : i32
    %c0_i32_2 = arith.constant 0 : i32
    return %arg0, %2, %c0_i32_0, %c0_i32_1 : i32, i32, i32, i32
  }
  func.func @transform_1(%arg0: i32, %arg1: i32) -> (i32, i32, i32, i32) {
    %c0_i32 = arith.constant 0 : i32
    %c0_i32_0 = arith.constant 0 : i32
    %c0_i32_1 = arith.constant 0 : i32
    return %arg0, %arg1, %c0_i32, %c0_i32_0 : i32, i32, i32, i32
  }
  func.func @transform_2(%arg0: i32, %arg1: i32) -> (i32, i32, i32, i32) {
    %c1_i32 = arith.constant 1 : i32
    %0 = arith.addi %arg1, %c1_i32 : i32
    %c16_i32 = arith.constant 16 : i32
    %1 = arith.muli %0, %c16_i32 : i32
    %c15_i32 = arith.constant 15 : i32
    %2 = arith.minsi %1, %c15_i32 : i32
    %c0_i32 = arith.constant 0 : i32
    %c0_i32_0 = arith.constant 0 : i32
    %c0_i32_1 = arith.constant 0 : i32
    return %arg0, %2, %c0_i32, %c0_i32_0 : i32, i32, i32, i32
  }
  func.func @transform_3(%arg0: i32, %arg1: i32) -> (i32, i32, i32) {
    %c0_i32 = arith.constant 0 : i32
    %c0_i32_0 = arith.constant 0 : i32
    %c0_i32_1 = arith.constant 0 : i32
    %c0_i32_2 = arith.constant 0 : i32
    return %c0_i32, %c0_i32_0, %c0_i32_1 : i32, i32, i32
  }
  func.func @transform_4(%arg0: i32, %arg1: i32) -> (i32, i32) {
    %c0_i32 = arith.constant 0 : i32
    %c0_i32_0 = arith.constant 0 : i32
    %c0_i32_1 = arith.constant 0 : i32
    return %c0_i32, %c0_i32_0 : i32, i32
  }
  func.func @transform_5(%arg0: i32, %arg1: i32) -> (i32, i32, i32, i32) {
    %c0_i32 = arith.constant 0 : i32
    %c0_i32_0 = arith.constant 0 : i32
    %c0_i32_1 = arith.constant 0 : i32
    return %arg0, %arg1, %c0_i32, %c0_i32_0 : i32, i32, i32, i32
  }
}

</mosaic_0001>

<llo_original>
// kernel: tpu_custom_call.1
$region0: #{tpu_custom_call.1}
  #allocation0 [shape = 'u32[]', space=smem, size = 0x4, offset = 0x4, fixed_abs, tag = 'smem constant byte address 0x4 - core index']
  #allocation1 [shape = 'u32[72,128]{1,0:T(1,128)}', space=vmem, size = 0x9000, scoped, tag = 'internal scratch']
  %s0 = inlined_call_operand.hbm [shape: bf16[2,16,16,16], index: 0, kind: input, shape index: {}]
  %s1 = inlined_call_operand.hbm [shape: bf16[2,16,16,16], index: 1, kind: input, shape index: {}]
  %s2 = inlined_call_operand.hbm [shape: bf16[2,16,16,16], index: 2, kind: input, shape index: {}]
  %s3 = inlined_call_operand.hbm [shape: f32[3,3,16], index: 3, kind: input, shape index: {}]
  %s4 = inlined_call_operand.vmem [shape: f32[1,16], index: 4, kind: input, shape index: {}]
  %s5 = inlined_call_operand.hbm [shape: bf16[2,16,16,16], index: 5, kind: output, shape index: {}]
  %s6 = sld [smem:[#allocation0]]
  $region69: #{tpu_custom_call.1} parent=0
    _
  %s8 = ssub.s32 1, %s6
  %s9 = scalar_select 0, %s8, %s6
  $region1: #{tpu_custom_call.1} parent=0
    #allocation2 [shape = 'u8[8192]{0}', space=vmem, size = 0x2000, scoped, tag = 'input window, operand 0']
    #allocation3 [shape = 's32[2]{0}', space=sflag, size = 0x8, scoped, tag = 'scoped memory for tpu_custom_call.1']
    #allocation4 [shape = 's32[2]{0}', space=sflag, size = 0x8, scoped, tag = 'scoped memory for tpu_custom_call.1']
    #allocation5 [shape = 'u8[131072]{0}', space=vmem, size = 0x20000, scoped, tag = 'input window, operand 1']
    #allocation6 [shape = 's32[2]{0}', space=sflag, size = 0x8, scoped, tag = 'scoped memory for tpu_custom_call.1']
    #allocation7 [shape = 'u8[8192]{0}', space=vmem, size = 0x2000, scoped, tag = 'input window, operand 2']
    #allocation8 [shape = 'u8[6144]{0}', space=vmem, size = 0x1800, scoped, tag = 'input window, operand 3, single buffered']
    #allocation9 [shape = 's32[1]{0}', space=sflag, size = 0x4, scoped, tag = 'scoped memory for tpu_custom_call.1']
    #allocation10 [shape = 'u8[131072]{0}', space=vmem, size = 0x20000, scoped, tag = 'output window, operand 0']
    %10 = vsyncpa [#allocation3], 0
    %s11 = scalar_lea.sflag [#allocation3], 1
    %12 = vsyncpa %s11, 0
    %13 = vsyncpa [#allocation6], 0
    %s14 = scalar_lea.sflag [#allocation6], 1
    %15 = vsyncpa %s14, 0
    %16 = vsyncpa [#allocation9], 0
    %17 = vsyncpa [#allocation4], 0
    %s18 = scalar_lea.sflag [#allocation4], 1
    %19 = vsyncpa %s18, 0
    loop: start=0, step=1, limit=4
    $region2: #{tpu_custom_call.1} parent=1 // loop_pre_header
      _
    $region3: #{tpu_custom_call.1} parent=1 // loop_header
      %s21 = sphi 0, %s25
      %p22 = scmp.ge.s32.totalorder %s21, 4
      %s28 = sphi 0, %s40
      %s29 = sphi 0, %s36
      %s30 = sphi 0, %s28
      %s31 = sphi 0, %s29
      %s32 = sphi 0, %s30
      %s33 = sphi 0, %s31
      %s53 = sphi 0, %s55
      %s56 = sphi 0, %s53
      %s57 = sphi 0, %s56
      %s73 = sphi 0, %s57
      %s81 = sphi 0, %s83
      %s84 = sphi 0, %s81
      %s85 = sphi 0, %s84
      %s101 = sphi 0, %s85
      %s117 = sphi 0, %s119
      %s120 = sphi 0, %s117
      %s121 = sphi 0, %s120
      %s137 = sphi 0, %s121
      %s141 = sphi 0, %s141
      %s143 = sphi 0, %s141
      %s144 = sphi 0, %s143
      %s158 = sphi 0, %s144
      %s162 = sphi 0, %s162
      %s164 = sphi 0, %s162
      %s165 = sphi 0, %s164
      %s179 = sphi 0, %s165
      %s187 = sphi 0, %s189
      %s190 = sphi 0, %s187
      %s191 = sphi 0, %s190
      %s207 = sphi 0, %s191
    $region4: #{tpu_custom_call.1} parent=1 // loop_header_branch
      %24 = sbr.rel (%p22) target = $region8
    $region5: #{tpu_custom_call.1} parent=1 // loop_body
      %s26 = ssub.s32 %s21, 1
      %s27 = ssub.s32 %s21, 2
      %s34 = sadd.s32 1, %s29
      %p35 = scmp.ge.s32.totalorder %s34, 1
      %s36 = scalar_select %p35, 0, %s34
      %s37 = sadd.s32 1, %s28
      %s38 = scalar_select %p35, %s37, %s28
      %p39 = scmp.ge.s32.totalorder %s38, 2
      %s40 = scalar_select %p39, 0, %s38
      %s41 = smul.u32 %s29, 16
      %s42 = ssub.s32 %s41, 1
      %p43 = scmp.gt.s32.totalorder %s42, 0
      %s44 = scalar_select %p43, %s42, 0
      %s45 = smul.u32 %s36, 16
      %s46 = ssub.s32 %s45, 1
      %p47 = scmp.gt.s32.totalorder %s46, 0
      %s48 = scalar_select %p47, %s46, 0
      %s49 = ssub.s32 %s28, %s40
      %s50 = ssub.s32 %s44, %s48
      %s51 = sor.u32 %s49, %s50
      %p52 = scmp.eq.s32.totalorder %s51, 0
      %s54 = sadd.s32 %s53, 1
      %s55 = scalar_select %p52, %s53, %s54
      %p58 = pneg %p52
      %p59 = scmp.eq.s32.totalorder %s21, 1
      %p60 = por %p58, %p59
      %p61 = scmp.ne.s32.totalorder %s53, %s56
      %p62 = scmp.eq.s32.totalorder %s21, 0
      %p63 = por %p61, %p62
      %p64 = scmp.ne.s32.totalorder %s53, %s56
      %p65 = scmp.eq.s32.totalorder %s26, 1
      %p66 = por %p64, %p65
      %p67 = scmp.ne.s32.totalorder %s56, %s57
      %p68 = scmp.eq.s32.totalorder %s26, 0
      %p69 = por %p67, %p68
      %p70 = scmp.ne.s32.totalorder %s56, %s57
      %p71 = scmp.eq.s32.totalorder %s27, 1
      %p72 = por %p70, %p71
      %p74 = scmp.ne.s32.totalorder %s57, %s73
      %p75 = scmp.eq.s32.totalorder %s27, 0
      %p76 = por %p74, %p75
      %s77 = ssub.s32 %s28, %s40
      %s78 = ssub.s32 %s29, %s36
      %s79 = sor.u32 %s77, %s78
      %p80 = scmp.eq.s32.totalorder %s79, 0
      %s82 = sadd.s32 %s81, 1
      %s83 = scalar_select %p80, %s81, %s82
      %p86 = pneg %p80
      %p87 = scmp.eq.s32.totalorder %s21, 1
      %p88 = por %p86, %p87
      %p89 = scmp.ne.s32.totalorder %s81, %s84
      %p90 = scmp.eq.s32.totalorder %s21, 0
      %p91 = por %p89, %p90
      %p92 = scmp.ne.s32.totalorder %s81, %s84
      %p93 = scmp.eq.s32.totalorder %s26, 1
      %p94 = por %p92, %p93
      %p95 = scmp.ne.s32.totalorder %s84, %s85
      %p96 = scmp.eq.s32.totalorder %s26, 0
      %p97 = por %p95, %p96
      %p98 = scmp.ne.s32.totalorder %s84, %s85
      %p99 = scmp.eq.s32.totalorder %s27, 1
      %p100 = por %p98, %p99
      %p102 = scmp.ne.s32.totalorder %s85, %s101
      %p103 = scmp.eq.s32.totalorder %s27, 0
      %p104 = por %p102, %p103
      %s105 = sadd.s32 %s29, 1
      %s106 = smul.u32 %s105, 16
      %p107 = scmp.lt.s32.totalorder %s106, 15
      %s108 = scalar_select %p107, %s106, 15
      %s109 = sadd.s32 %s36, 1
      %s110 = smul.u32 %s109, 16
      %p111 = scmp.lt.s32.totalorder %s110, 15
      %s112 = scalar_select %p111, %s110, 15
      %s113 = ssub.s32 %s28, %s40
      %s114 = ssub.s32 %s108, %s112
      %s115 = sor.u32 %s113, %s114
      %p116 = scmp.eq.s32.totalorder %s115, 0
      %s118 = sadd.s32 %s117, 1
      %s119 = scalar_select %p116, %s117, %s118
      %p122 = pneg %p116
      %p123 = scmp.eq.s32.totalorder %s21, 1
      %p124 = por %p122, %p123
      %p125 = scmp.ne.s32.totalorder %s117, %s120
      %p126 = scmp.eq.s32.totalorder %s21, 0
      %p127 = por %p125, %p126
      %p128 = scmp.ne.s32.totalorder %s117, %s120
      %p129 = scmp.eq.s32.totalorder %s26, 1
      %p130 = por %p128, %p129
      %p131 = scmp.ne.s32.totalorder %s120, %s121
      %p132 = scmp.eq.s32.totalorder %s26, 0
      %p133 = por %p131, %p132
      %p134 = scmp.ne.s32.totalorder %s120, %s121
      %p135 = scmp.eq.s32.totalorder %s27, 1
      %p136 = por %p134, %p135
      %p138 = scmp.ne.s32.totalorder %s121, %s137
      %p139 = scmp.eq.s32.totalorder %s27, 0
      %p140 = por %p138, %p139
      %s142 = sadd.s32 %s141, 1
      %p145 = scmp.eq.s32.totalorder %s21, 1
      %p146 = scmp.ne.s32.totalorder %s141, %s143
      %p147 = scmp.eq.s32.totalorder %s21, 0
      %p148 = por %p146, %p147
      %p149 = scmp.ne.s32.totalorder %s141, %s143
      %p150 = scmp.eq.s32.totalorder %s26, 1
      %p151 = por %p149, %p150
      %p152 = scmp.ne.s32.totalorder %s143, %s144
      %p153 = scmp.eq.s32.totalorder %s26, 0
      %p154 = por %p152, %p153
      %p155 = scmp.ne.s32.totalorder %s143, %s144
      %p156 = scmp.eq.s32.totalorder %s27, 1
      %p157 = por %p155, %p156
      %p159 = scmp.ne.s32.totalorder %s144, %s158
      %p160 = scmp.eq.s32.totalorder %s27, 0
      %p161 = por %p159, %p160
      %s163 = sadd.s32 %s162, 1
      %p166 = scmp.eq.s32.totalorder %s21, 1
      %p167 = scmp.ne.s32.totalorder %s162, %s164
      %p168 = scmp.eq.s32.totalorder %s21, 0
      %p169 = por %p167, %p168
      %p170 = scmp.ne.s32.totalorder %s162, %s164
      %p171 = scmp.eq.s32.totalorder %s26, 1
      %p172 = por %p170, %p171
      %p173 = scmp.ne.s32.totalorder %s164, %s165
      %p174 = scmp.eq.s32.totalorder %s26, 0
      %p175 = por %p173, %p174
      %p176 = scmp.ne.s32.totalorder %s164, %s165
      %p177 = scmp.eq.s32.totalorder %s27, 1
      %p178 = por %p176, %p177
      %p180 = scmp.ne.s32.totalorder %s165, %s179
      %p181 = scmp.eq.s32.totalorder %s27, 0
      %p182 = por %p180, %p181
      %s183 = ssub.s32 %s28, %s40
      %s184 = ssub.s32 %s29, %s36
      %s185 = sor.u32 %s183, %s184
      %p186 = scmp.eq.s32.totalorder %s185, 0
      %s188 = sadd.s32 %s187, 1
      %s189 = scalar_select %p186, %s187, %s188
      %p192 = pneg %p186
      %p193 = scmp.eq.s32.totalorder %s21, 1
      %p194 = por %p192, %p193
      %p195 = scmp.ne.s32.totalorder %s187, %s190
      %p196 = scmp.eq.s32.totalorder %s21, 0
      %p197 = por %p195, %p196
      %p198 = scmp.ne.s32.totalorder %s187, %s190
      %p199 = scmp.eq.s32.totalorder %s26, 1
      %p200 = por %p198, %p199
      %p201 = scmp.ne.s32.totalorder %s190, %s191
      %p202 = scmp.eq.s32.totalorder %s26, 0
      %p203 = por %p201, %p202
      %p204 = scmp.ne.s32.totalorder %s190, %s191
      %p205 = scmp.eq.s32.totalorder %s27, 1
      %p206 = por %p204, %p205
      %p208 = scmp.ne.s32.totalorder %s191, %s207
      %p209 = scmp.eq.s32.totalorder %s27, 0
      %p210 = por %p208, %p209
      %p211 = scmp.le.s32.totalorder 1, %s21
      %p212 = scmp.lt.s32.totalorder %s21, 3
      %p213 = pnand %p211, %p212
      %p214 = pneg %p213
      // Predicated region
      $region9: #{tpu_custom_call.1} parent=5 // pred_check
        _
      $region10: #{tpu_custom_call.1} parent=5 // pred_check_branch
        %216 = sbr.rel (%p213) target = $region12
      $region11: #{tpu_custom_call.1} parent=5 // pred_region
        %s217 = ssub.s32 %s21, 1
        // Predicated region
        $region13: #{tpu_custom_call.1} parent=11 // pred_check
          %p218 = pneg %p154
        $region14: #{tpu_custom_call.1} parent=11 // pred_check_branch
          %220 = sbr.rel (%p218) target = $region16
        $region15: #{tpu_custom_call.1} parent=11 // pred_region
          %222 = vsyncadd [#allocation9], 0
          %s223 = sshll.u32 %s3, 4
          %s224 = int_to_ptr.hbm [resolvable:$true] %s223
          %s225 = sshll.u32 [#allocation8], 4
          %s226 = int_to_ptr.vmem [resolvable:$true] %s225
          %231 = dma.hbm_to_vmem [thread:$0]  %s224, 192, %s226, [#allocation9], 64, 64, 4
        $region16: #{tpu_custom_call.1} parent=11 // pred_fallthru
          _
        // Predicated region
        $region17: #{tpu_custom_call.1} parent=11 // pred_check
          %p232 = pneg %p175
        $region18: #{tpu_custom_call.1} parent=11 // pred_check_branch
          %234 = sbr.rel (%p232) target = $region20
        $region19: #{tpu_custom_call.1} parent=11 // pred_region
          _
        $region20: #{tpu_custom_call.1} parent=11 // pred_fallthru
          _
      $region12: #{tpu_custom_call.1} parent=5 // pred_fallthru
        _
      %p235 = scmp.lt.s32.totalorder %s21, 2
      // Predicated region
      $region21: #{tpu_custom_call.1} parent=5 // pred_check
        %p236 = pneg %p235
      $region22: #{tpu_custom_call.1} parent=5 // pred_check_branch
        %238 = sbr.rel (%p236) target = $region24
      $region23: #{tpu_custom_call.1} parent=5 // pred_region
        // Predicated region
        $region25: #{tpu_custom_call.1} parent=23 // pred_check
          %p239 = pneg %p63
        $region26: #{tpu_custom_call.1} parent=23 // pred_check_branch
          %241 = sbr.rel (%p239) target = $region28
        $region27: #{tpu_custom_call.1} parent=23 // pred_region
          %s242 = sand.u32 %s53, 1
          %s243 = scalar_lea.sflag [#allocation3], %s242
          %s244 = sand.u32 %s53, 1
          %s245 = smul.addr %s244, 8
          %s246 = scalar_lea.vmem [#allocation2], %s245
          %s247 = smul.u32 %s29, 16
          %s248 = ssub.s32 %s247, 1
          %p249 = scmp.gt.s32.totalorder %s248, 0
          %s250 = scalar_select %p249, %s248, 0
          %252 = vsyncadd %s243, 0
          %s253 = smul.addr %s250, 2
          %s254 = smul.addr %s28, 32
          %s255 = sadd.s32 %s253, %s254
          %s256 = smul.addr %s255, 4
          %s257 = scalar_lea.hbm %s0, %s256
          %s258 = sshll.u32 %s257, 4
          %s259 = int_to_ptr.hbm [resolvable:$true] %s258
          %s260 = sshll.u32 %s246, 4
          %s261 = int_to_ptr.vmem [resolvable:$true] %s260
          %266 = dma.hbm_to_vmem [thread:$0]  %s259, 128, %s261, %s243, 64, 64, 4
        $region28: #{tpu_custom_call.1} parent=23 // pred_fallthru
          _
        // Predicated region
        $region29: #{tpu_custom_call.1} parent=23 // pred_check
          %p267 = pneg %p91
        $region30: #{tpu_custom_call.1} parent=23 // pred_check_branch
          %269 = sbr.rel (%p267) target = $region32
        $region31: #{tpu_custom_call.1} parent=23 // pred_region
          %s270 = sand.u32 %s21, 1
          %s271 = scalar_lea.sflag [#allocation6], %s270
          %s272 = sand.u32 %s81, 1
          %s273 = smul.addr %s272, 128
          %s274 = scalar_lea.vmem [#allocation5], %s273
          %s275 = smul.u32 16, %s29
          %277 = vsyncadd %s271, 0
          %s278 = smul.addr %s275, 2
          %s279 = smul.addr %s28, 32
          %s280 = sadd.s32 %s278, %s279
          %s281 = smul.addr %s280, 4
          %s282 = scalar_lea.hbm %s1, %s281
          %s283 = sshll.u32 %s282, 4
          %s284 = int_to_ptr.hbm [resolvable:$true] %s283
          %s285 = sshll.u32 %s274, 4
          %s286 = int_to_ptr.vmem [resolvable:$true] %s285
          %291 = dma.hbm_to_vmem [thread:$0]  %s284, 2048, %s286, %s271, 64, 64, 4
        $region32: #{tpu_custom_call.1} parent=23 // pred_fallthru
          _
        // Predicated region
        $region33: #{tpu_custom_call.1} parent=23 // pred_check
          %p292 = pneg %p127
        $region34: #{tpu_custom_call.1} parent=23 // pred_check_branch
          %294 = sbr.rel (%p292) target = $region36
        $region35: #{tpu_custom_call.1} parent=23 // pred_region
          %s295 = sand.u32 %s21, 1
          %s296 = scalar_lea.sflag [#allocation6], %s295
          %s297 = sand.u32 %s117, 1
          %s298 = smul.addr %s297, 8
          %s299 = scalar_lea.vmem [#allocation7], %s298
          %s300 = sadd.s32 %s29, 1
          %s301 = smul.u32 %s300, 16
          %p302 = scmp.lt.s32.totalorder %s301, 15
          %s303 = scalar_select %p302, %s301, 15
          %305 = vsyncadd %s296, 0
          %s306 = smul.addr %s303, 2
          %s307 = smul.addr %s28, 32
          %s308 = sadd.s32 %s306, %s307
          %s309 = smul.addr %s308, 4
          %s310 = scalar_lea.hbm %s2, %s309
          %s311 = sshll.u32 %s310, 4
          %s312 = int_to_ptr.hbm [resolvable:$true] %s311
          %s313 = sshll.u32 %s299, 4
          %s314 = int_to_ptr.vmem [resolvable:$true] %s313
          %319 = dma.hbm_to_vmem [thread:$0]  %s312, 128, %s314, %s296, 64, 64, 4
        $region36: #{tpu_custom_call.1} parent=23 // pred_fallthru
          _
      $region24: #{tpu_custom_call.1} parent=5 // pred_fallthru
        _
      %p320 = scmp.le.s32.totalorder 1, %s21
      %p321 = scmp.lt.s32.totalorder %s21, 3
      %p322 = pnand %p320, %p321
      %p323 = pneg %p322
      // Predicated region
      $region37: #{tpu_custom_call.1} parent=5 // pred_check
        _
      $region38: #{tpu_custom_call.1} parent=5 // pred_check_branch
        %325 = sbr.rel (%p322) target = $region40
      $region39: #{tpu_custom_call.1} parent=5 // pred_region
        %s326 = ssub.s32 %s21, 1
        %s327 = sand.u32 %s56, 1
        %s328 = scalar_lea.sflag [#allocation3], %s327
        %s329 = sand.u32 %s56, 1
        %s330 = smul.addr %s329, 8
        %s331 = scalar_lea.vmem [#allocation2], %s330
        // Predicated region
        $region41: #{tpu_custom_call.1} parent=39 // pred_check
          %p332 = pneg %p69
        $region42: #{tpu_custom_call.1} parent=39 // pred_check_branch
          %334 = sbr.rel (%p332) target = $region44
        $region43: #{tpu_custom_call.1} parent=39 // pred_region
          %336 = dma.done %s328, 128
        $region44: #{tpu_custom_call.1} parent=39 // pred_fallthru
          _
        %s337 = sand.u32 %s26, 1
        %s338 = scalar_lea.sflag [#allocation6], %s337
        %s339 = sand.u32 %s84, 1
        %s340 = smul.addr %s339, 128
        %s341 = scalar_lea.vmem [#allocation5], %s340
        // Predicated region
        $region45: #{tpu_custom_call.1} parent=39 // pred_check
          %p342 = pneg %p97
        $region46: #{tpu_custom_call.1} parent=39 // pred_check_branch
          %344 = sbr.rel (%p342) target = $region48
        $region47: #{tpu_custom_call.1} parent=39 // pred_region
          %346 = dma.done %s338, 2048
        $region48: #{tpu_custom_call.1} parent=39 // pred_fallthru
          _
        %s347 = sand.u32 %s26, 1
        %s348 = scalar_lea.sflag [#allocation6], %s347
        %s349 = sand.u32 %s120, 1
        %s350 = smul.addr %s349, 8
        %s351 = scalar_lea.vmem [#allocation7], %s350
        // Predicated region
        $region49: #{tpu_custom_call.1} parent=39 // pred_check
          %p352 = pneg %p133
        $region50: #{tpu_custom_call.1} parent=39 // pred_check_branch
          %354 = sbr.rel (%p352) target = $region52
        $region51: #{tpu_custom_call.1} parent=39 // pred_region
          %356 = dma.done %s348, 128
        $region52: #{tpu_custom_call.1} parent=39 // pred_fallthru
          _
        // Predicated region
        $region53: #{tpu_custom_call.1} parent=39 // pred_check
          %p357 = pneg %p154
        $region54: #{tpu_custom_call.1} parent=39 // pred_check_branch
          %359 = sbr.rel (%p357) target = $region56
        $region55: #{tpu_custom_call.1} parent=39 // pred_region
          %361 = dma.done [#allocation9], 192
        $region56: #{tpu_custom_call.1} parent=39 // pred_fallthru
          _
        %s362 = sand.u32 %s56, 1
        %s363 = scalar_lea.sflag [#allocation3], %s362
        %s364 = sand.u32 %s56, 1
        %s365 = smul.addr %s364, 8
        %s366 = scalar_lea.vmem [#allocation2], %s365
        %p367 = pneg %p69
        %p368 = pneg %p66
        %s369 = sand.u32 %s26, 1
        %s370 = scalar_lea.sflag [#allocation6], %s369
        %s371 = sand.u32 %s84, 1
        %s372 = smul.addr %s371, 128
        %s373 = scalar_lea.vmem [#allocation5], %s372
        %p374 = pneg %p97
        %p375 = pneg %p94
        %s376 = sand.u32 %s26, 1
        %s377 = scalar_lea.sflag [#allocation6], %s376
        %s378 = sand.u32 %s120, 1
        %s379 = smul.addr %s378, 8
        %s380 = scalar_lea.vmem [#allocation7], %s379
        %p381 = pneg %p133
        %p382 = pneg %p130
        %p383 = pneg %p154
        %p384 = pneg %p151
        %p385 = pneg %p175
        %p386 = pneg %p172
        %p387 = pneg %p203
        %p388 = pneg %p200
        %s389 = sand.u32 %s190, 1
        %s390 = scalar_lea.sflag [#allocation4], %s389
        %s391 = sand.u32 %s190, 1
        %s392 = smul.addr %s391, 128
        %s393 = scalar_lea.vmem [#allocation10], %s392
        %s394 = smul.u32 %s31, 16
        %s395 = ssub.s32 %s394, 1
        %p396 = scmp.gt.s32.totalorder %s395, 0
        %s397 = scalar_select %p396, %s395, 0
        %s398 = smul.u32 16, %s31
        %s399 = sadd.s32 %s31, 1
        %s400 = smul.u32 %s399, 16
        %p401 = scmp.lt.s32.totalorder %s400, 15
        %s402 = scalar_select %p401, %s400, 15
        %s403 = smul.u32 16, %s31
        %v404 = vld [vmem:[%s331] sm:$0xf]
        %v405 = vld [vmem:[%s331 + $0x4] sm:$0xf]
        %p406 = scmp.gt.s32.totalorder %s31, 0
        %s407 = scalar_select %p406, 1, 0
        %s408 = scvt.s32.f32 %s407
        %p410 = scmp.ne.f32.partialorder %s408, %s408
        %s411 = sshrl.u32 %s408, 16
        %s412 = sand.u32 %s411, 1
        %s413 = sadd.s32 32767, %s412
        %s414 = sadd.s32 %s408, %s413
        %s415 = sand.u32 %s414, 4294901760
        %s416 = scalar_select %p410, 2143289344, %s415
        %s418 = sshrl.u32 %s416, 16
        %s419 = sshll.u32 %s418, 16
        %s420 = sor.u32 %s418, %s419
        %v421 = vstv %s420
        %v423 = vunpack.c.l.bf16 %v404
        %v424 = vunpack.c.l.bf16 %v405
        %v425 = vunpack.c.l.bf16 %v421
        %v426 = vmul.f32 %v423, %v425
        %v427 = vmul.f32 %v424, %v425
        %v428 = vpack.c.bf16 %v426, %v426
        %v429 = vpack.c.bf16 %v427, %v427
        %v430 = vld [vmem:[%s351] sm:$0xf]
        %v431 = vld [vmem:[%s351 + $0x4] sm:$0xf]
        %p432 = scmp.lt.s32.totalorder %s31, 0
        %s433 = scalar_select %p432, 1, 0
        %s434 = scvt.s32.f32 %s433
        %p436 = scmp.ne.f32.partialorder %s434, %s434
        %s437 = sshrl.u32 %s434, 16
        %s438 = sand.u32 %s437, 1
        %s439 = sadd.s32 32767, %s438
        %s440 = sadd.s32 %s434, %s439
        %s441 = sand.u32 %s440, 4294901760
        %s442 = scalar_select %p436, 2143289344, %s441
        %s444 = sshrl.u32 %s442, 16
        %s445 = sshll.u32 %s444, 16
        %s446 = sor.u32 %s444, %s445
        %v447 = vstv %s446
        %v449 = vunpack.c.l.bf16 %v430
        %v450 = vunpack.c.l.bf16 %v431
        %v451 = vunpack.c.l.bf16 %v447
        %v452 = vmul.f32 %v449, %v451
        %v453 = vmul.f32 %v450, %v451
        %v454 = vpack.c.bf16 %v452, %v452
        %v455 = vpack.c.bf16 %v453, %v453
        %v456 = vld [vmem:[%s341] sm:$0xf]
        %v457 = vld [vmem:[%s341 + $0x4] sm:$0xf]
        %v458 = vld [vmem:[%s341 + $0x8] sm:$0xf]
        %v459 = vld [vmem:[%s341 + $0xc] sm:$0xf]
        %v460 = vld [vmem:[%s341 + $0x10] sm:$0xf]
        %v461 = vld [vmem:[%s341 + $0x14] sm:$0xf]
        %v462 = vld [vmem:[%s341 + $0x18] sm:$0xf]
        %v463 = vld [vmem:[%s341 + $0x1c] sm:$0xf]
        %v464 = vld [vmem:[%s341 + $0x20] sm:$0xf]
        %v465 = vld [vmem:[%s341 + $0x24] sm:$0xf]
        %v466 = vld [vmem:[%s341 + $0x28] sm:$0xf]
        %v467 = vld [vmem:[%s341 + $0x2c] sm:$0xf]
        %v468 = vld [vmem:[%s341 + $0x30] sm:$0xf]
        %v469 = vld [vmem:[%s341 + $0x34] sm:$0xf]
        %v470 = vld [vmem:[%s341 + $0x38] sm:$0xf]
        %v471 = vld [vmem:[%s341 + $0x3c] sm:$0xf]
        %v472 = vld [vmem:[%s341 + $0x40] sm:$0xf]
        %v473 = vld [vmem:[%s341 + $0x44] sm:$0xf]
        %v474 = vld [vmem:[%s341 + $0x48] sm:$0xf]
        %v475 = vld [vmem:[%s341 + $0x4c] sm:$0xf]
        %v476 = vld [vmem:[%s341 + $0x50] sm:$0xf]
        %v477 = vld [vmem:[%s341 + $0x54] sm:$0xf]
        %v478 = vld [vmem:[%s341 + $0x58] sm:$0xf]
        %v479 = vld [vmem:[%s341 + $0x5c] sm:$0xf]
        %v480 = vld [vmem:[%s341 + $0x60] sm:$0xf]
        %v481 = vld [vmem:[%s341 + $0x64] sm:$0xf]
        %v482 = vld [vmem:[%s341 + $0x68] sm:$0xf]
        %v483 = vld [vmem:[%s341 + $0x6c] sm:$0xf]
        %v484 = vld [vmem:[%s341 + $0x70] sm:$0xf]
        %v485 = vld [vmem:[%s341 + $0x74] sm:$0xf]
        %v486 = vld [vmem:[%s341 + $0x78] sm:$0xf]
        %v487 = vld [vmem:[%s341 + $0x7c] sm:$0xf]
        %v488 = vld [vmem:[#allocation8] sm:$0x7]
        %v489 = vld [vmem:[#allocation8 + $0x4] sm:$0x7]
        %v490 = vld [vmem:[#allocation8 + $0x8] sm:$0x7]
        %v491 = vlaneseq
        %v492 = vshrl.u32 %v491, 7
        %v493 = vadd.s32 %v492, 8
        %vm494 = vcmp.gt.s32.totalorder %v492, 0
        %vm495 = vcmp.gt.s32.totalorder %v493, 0
        %v496 = vsel %vm494, 1, 0
        %v497 = vsel %vm495, 1, 0
        %v498 = vcvt.s32.f32 %v496
        %v499 = vcvt.s32.f32 %v497
        %vm500 = vcmp.lt.s32.totalorder %v492, 15
        %vm501 = vcmp.lt.s32.totalorder %v493, 15
        %v502 = vsel %vm500, 1, 0
        %v503 = vsel %vm501, 1, 0
        %v504 = vcvt.s32.f32 %v502
        %v505 = vcvt.s32.f32 %v503
        %v506 = vunpack.c.l.bf16 %v428
        %v507 = vunpack.c.l.bf16 %v429
        %v508 = vunpack.c.l.bf16 %v456
        %v509 = vunpack.c.l.bf16 %v457
        %v510 = vunpack.c.l.bf16 %v458
        %v511 = vunpack.c.l.bf16 %v459
        %v512 = vunpack.c.l.bf16 %v460
        %v513 = vunpack.c.l.bf16 %v461
        %v514 = vunpack.c.l.bf16 %v462
        %v515 = vunpack.c.l.bf16 %v463
        %v516 = vunpack.c.l.bf16 %v464
        %v517 = vunpack.c.l.bf16 %v465
        %v518 = vunpack.c.l.bf16 %v466
        %v519 = vunpack.c.l.bf16 %v467
        %v520 = vunpack.c.l.bf16 %v468
        %v521 = vunpack.c.l.bf16 %v469
        %v522 = vunpack.c.l.bf16 %v470
        %v523 = vunpack.c.l.bf16 %v471
        %v524 = vunpack.c.l.bf16 %v472
        %v525 = vunpack.c.l.bf16 %v473
        %v526 = vunpack.c.l.bf16 %v474
        %v527 = vunpack.c.l.bf16 %v475
        %v528 = vunpack.c.l.bf16 %v476
        %v529 = vunpack.c.l.bf16 %v477
        %v530 = vunpack.c.l.bf16 %v478
        %v531 = vunpack.c.l.bf16 %v479
        %v532 = vunpack.c.l.bf16 %v480
        %v533 = vunpack.c.l.bf16 %v481
        %v534 = vunpack.c.l.bf16 %v482
        %v535 = vunpack.c.l.bf16 %v483
        %v536 = vunpack.c.l.bf16 %v484
        %v537 = vunpack.c.l.bf16 %v485
        %v538 = vrot.slane %v506, 7
        %v539 = vrot.slane %v508, 7
        %v540 = vrot.slane %v510, 7
        %v541 = vrot.slane %v512, 7
        %v542 = vrot.slane %v514, 7
        %v543 = vrot.slane %v516, 7
        %v544 = vrot.slane %v518, 7
        %v545 = vrot.slane %v520, 7
        %v546 = vrot.slane %v522, 7
        %v547 = vrot.slane %v524, 7
        %v548 = vrot.slane %v526, 7
        %v549 = vrot.slane %v528, 7
        %v550 = vrot.slane %v530, 7
        %v551 = vrot.slane %v532, 7
        %v552 = vrot.slane %v534, 7
        %v553 = vrot.slane %v536, 7
        %v554 = vrot.slane %v507, 7
        %v555 = vrot.slane %v509, 7
        %v556 = vrot.slane %v511, 7
        %v557 = vrot.slane %v513, 7
        %v558 = vrot.slane %v515, 7
        %v559 = vrot.slane %v517, 7
        %v560 = vrot.slane %v519, 7
        %v561 = vrot.slane %v521, 7
        %v562 = vrot.slane %v523, 7
        %v563 = vrot.slane %v525, 7
        %v564 = vrot.slane %v527, 7
        %v565 = vrot.slane %v529, 7
        %v566 = vrot.slane %v531, 7
        %v567 = vrot.slane %v533, 7
        %v568 = vrot.slane %v535, 7
        %v569 = vrot.slane %v537, 7
        %vm570 = vcmp.lt.s32.totalorder %v492, 1
        %v571 = vsel %vm570, %v538, %v554
        %v572 = vsel %vm570, %v539, %v555
        %v573 = vsel %vm570, %v540, %v556
        %v574 = vsel %vm570, %v541, %v557
        %v575 = vsel %vm570, %v542, %v558
        %v576 = vsel %vm570, %v543, %v559
        %v577 = vsel %vm570, %v544, %v560
        %v578 = vsel %vm570, %v545, %v561
        %v579 = vsel %vm570, %v546, %v562
        %v580 = vsel %vm570, %v547, %v563
        %v581 = vsel %vm570, %v548, %v564
        %v582 = vsel %vm570, %v549, %v565
        %v583 = vsel %vm570, %v550, %v566
        %v584 = vsel %vm570, %v551, %v567
        %v585 = vsel %vm570, %v552, %v568
        %v586 = vsel %vm570, %v553, %v569
        %v587 = vsel %vm570, %v554, %v538
        %v588 = vsel %vm570, %v555, %v539
        %v589 = vsel %vm570, %v556, %v540
        %v590 = vsel %vm570, %v557, %v541
        %v591 = vsel %vm570, %v558, %v542
        %v592 = vsel %vm570, %v559, %v543
        %v593 = vsel %vm570, %v560, %v544
        %v594 = vsel %vm570, %v561, %v545
        %v595 = vsel %vm570, %v562, %v546
        %v596 = vsel %vm570, %v563, %v547
        %v597 = vsel %vm570, %v564, %v548
        %v598 = vsel %vm570, %v565, %v549
        %v599 = vsel %vm570, %v566, %v550
        %v600 = vsel %vm570, %v567, %v551
        %v601 = vsel %vm570, %v568, %v552
        %v602 = vsel %vm570, %v569, %v553
        %v603 = vmul.f32 %v587, %v498
        %v604 = vmul.f32 %v571, %v499
        %v605 = vmul.f32 %v588, %v498
        %v606 = vmul.f32 %v572, %v499
        %v607 = vmul.f32 %v589, %v498
        %v608 = vmul.f32 %v573, %v499
        %v609 = vmul.f32 %v590, %v498
        %v610 = vmul.f32 %v574, %v499
        %v611 = vmul.f32 %v591, %v498
        %v612 = vmul.f32 %v575, %v499
        %v613 = vmul.f32 %v592, %v498
        %v614 = vmul.f32 %v576, %v499
        %v615 = vmul.f32 %v593, %v498
        %v616 = vmul.f32 %v577, %v499
        %v617 = vmul.f32 %v594, %v498
        %v618 = vmul.f32 %v578, %v499
        %v619 = vmul.f32 %v595, %v498
        %v620 = vmul.f32 %v579, %v499
        %v621 = vmul.f32 %v596, %v498
        %v622 = vmul.f32 %v580, %v499
        %v623 = vmul.f32 %v597, %v498
        %v624 = vmul.f32 %v581, %v499
        %v625 = vmul.f32 %v598, %v498
        %v626 = vmul.f32 %v582, %v499
        %v627 = vmul.f32 %v599, %v498
        %v628 = vmul.f32 %v583, %v499
        %v629 = vmul.f32 %v600, %v498
        %v630 = vmul.f32 %v584, %v499
        %v631 = vmul.f32 %v601, %v498
        %v632 = vmul.f32 %v585, %v499
        %v633 = vmul.f32 %v602, %v498
        %v634 = vmul.f32 %v586, %v499
        %v635 = vrot.slane %v506, 1
        %v636 = vrot.slane %v508, 1
        %v637 = vrot.slane %v510, 1
        %v638 = vrot.slane %v512, 1
        %v639 = vrot.slane %v514, 1
        %v640 = vrot.slane %v516, 1
        %v641 = vrot.slane %v518, 1
        %v642 = vrot.slane %v520, 1
        %v643 = vrot.slane %v522, 1
        %v644 = vrot.slane %v524, 1
        %v645 = vrot.slane %v526, 1
        %v646 = vrot.slane %v528, 1
        %v647 = vrot.slane %v530, 1
        %v648 = vrot.slane %v532, 1
        %v649 = vrot.slane %v534, 1
        %v650 = vrot.slane %v536, 1
        %v651 = vrot.slane %v507, 1
        %v652 = vrot.slane %v509, 1
        %v653 = vrot.slane %v511, 1
        %v654 = vrot.slane %v513, 1
        %v655 = vrot.slane %v515, 1
        %v656 = vrot.slane %v517, 1
        %v657 = vrot.slane %v519, 1
        %v658 = vrot.slane %v521, 1
        %v659 = vrot.slane %v523, 1
        %v660 = vrot.slane %v525, 1
        %v661 = vrot.slane %v527, 1
        %v662 = vrot.slane %v529, 1
        %v663 = vrot.slane %v531, 1
        %v664 = vrot.slane %v533, 1
        %v665 = vrot.slane %v535, 1
        %v666 = vrot.slane %v537, 1
        %vm667 = vcmp.lt.s32.totalorder %v492, 7
        %v668 = vsel %vm667, %v635, %v651
        %v669 = vsel %vm667, %v636, %v652
        %v670 = vsel %vm667, %v637, %v653
        %v671 = vsel %vm667, %v638, %v654
        %v672 = vsel %vm667, %v639, %v655
        %v673 = vsel %vm667, %v640, %v656
        %v674 = vsel %vm667, %v641, %v657
        %v675 = vsel %vm667, %v642, %v658
        %v676 = vsel %vm667, %v643, %v659
        %v677 = vsel %vm667, %v644, %v660
        %v678 = vsel %vm667, %v645, %v661
        %v679 = vsel %vm667, %v646, %v662
        %v680 = vsel %vm667, %v647, %v663
        %v681 = vsel %vm667, %v648, %v664
        %v682 = vsel %vm667, %v649, %v665
        %v683 = vsel %vm667, %v650, %v666
        %v684 = vsel %vm667, %v651, %v635
        %v685 = vsel %vm667, %v652, %v636
        %v686 = vsel %vm667, %v653, %v637
        %v687 = vsel %vm667, %v654, %v638
        %v688 = vsel %vm667, %v655, %v639
        %v689 = vsel %vm667, %v656, %v640
        %v690 = vsel %vm667, %v657, %v641
        %v691 = vsel %vm667, %v658, %v642
        %v692 = vsel %vm667, %v659, %v643
        %v693 = vsel %vm667, %v660, %v644
        %v694 = vsel %vm667, %v661, %v645
        %v695 = vsel %vm667, %v662, %v646
        %v696 = vsel %vm667, %v663, %v647
        %v697 = vsel %vm667, %v664, %v648
        %v698 = vsel %vm667, %v665, %v649
        %v699 = vsel %vm667, %v666, %v650
        %v700 = vmul.f32 %v668, %v504
        %v701 = vmul.f32 %v684, %v505
        %v702 = vmul.f32 %v669, %v504
        %v703 = vmul.f32 %v685, %v505
        %v704 = vmul.f32 %v670, %v504
        %v705 = vmul.f32 %v686, %v505
        %v706 = vmul.f32 %v671, %v504
        %v707 = vmul.f32 %v687, %v505
        %v708 = vmul.f32 %v672, %v504
        %v709 = vmul.f32 %v688, %v505
        %v710 = vmul.f32 %v673, %v504
        %v711 = vmul.f32 %v689, %v505
        %v712 = vmul.f32 %v674, %v504
        %v713 = vmul.f32 %v690, %v505
        %v714 = vmul.f32 %v675, %v504
        %v715 = vmul.f32 %v691, %v505
        %v716 = vmul.f32 %v676, %v504
        %v717 = vmul.f32 %v692, %v505
        %v718 = vmul.f32 %v677, %v504
        %v719 = vmul.f32 %v693, %v505
        %v720 = vmul.f32 %v678, %v504
        %v721 = vmul.f32 %v694, %v505
        %v722 = vmul.f32 %v679, %v504
        %v723 = vmul.f32 %v695, %v505
        %v724 = vmul.f32 %v680, %v504
        %v725 = vmul.f32 %v696, %v505
        %v726 = vmul.f32 %v681, %v504
        %v727 = vmul.f32 %v697, %v505
        %v728 = vmul.f32 %v682, %v504
        %v729 = vmul.f32 %v698, %v505
        %v730 = vmul.f32 %v683, %v504
        %v731 = vmul.f32 %v699, %v505
        %v732 = vperm.slane %v488, 0
        %v733 = vmul.f32 %v603, %v732
        %v734 = vmul.f32 %v604, %v732
        %v735 = vmul.f32 %v605, %v732
        %v736 = vmul.f32 %v606, %v732
        %v737 = vmul.f32 %v607, %v732
        %v738 = vmul.f32 %v608, %v732
        %v739 = vmul.f32 %v609, %v732
        %v740 = vmul.f32 %v610, %v732
        %v741 = vmul.f32 %v611, %v732
        %v742 = vmul.f32 %v612, %v732
        %v743 = vmul.f32 %v613, %v732
        %v744 = vmul.f32 %v614, %v732
        %v745 = vmul.f32 %v615, %v732
        %v746 = vmul.f32 %v616, %v732
        %v747 = vmul.f32 %v617, %v732
        %v748 = vmul.f32 %v618, %v732
        %v749 = vmul.f32 %v619, %v732
        %v750 = vmul.f32 %v620, %v732
        %v751 = vmul.f32 %v621, %v732
        %v752 = vmul.f32 %v622, %v732
        %v753 = vmul.f32 %v623, %v732
        %v754 = vmul.f32 %v624, %v732
        %v755 = vmul.f32 %v625, %v732
        %v756 = vmul.f32 %v626, %v732
        %v757 = vmul.f32 %v627, %v732
        %v758 = vmul.f32 %v628, %v732
        %v759 = vmul.f32 %v629, %v732
        %v760 = vmul.f32 %v630, %v732
        %v761 = vmul.f32 %v631, %v732
        %v762 = vmul.f32 %v632, %v732
        %v763 = vmul.f32 %v633, %v732
        %v764 = vmul.f32 %v634, %v732
        %v765 = vadd.f32 %v733, 0.0
        %v766 = vadd.f32 %v734, 0.0
        %v767 = vadd.f32 %v735, 0.0
        %v768 = vadd.f32 %v736, 0.0
        %v769 = vadd.f32 %v737, 0.0
        %v770 = vadd.f32 %v738, 0.0
        %v771 = vadd.f32 %v739, 0.0
        %v772 = vadd.f32 %v740, 0.0
        %v773 = vadd.f32 %v741, 0.0
        %v774 = vadd.f32 %v742, 0.0
        %v775 = vadd.f32 %v743, 0.0
        %v776 = vadd.f32 %v744, 0.0
        %v777 = vadd.f32 %v745, 0.0
        %v778 = vadd.f32 %v746, 0.0
        %v779 = vadd.f32 %v747, 0.0
        %v780 = vadd.f32 %v748, 0.0
        %v781 = vadd.f32 %v749, 0.0
        %v782 = vadd.f32 %v750, 0.0
        %v783 = vadd.f32 %v751, 0.0
        %v784 = vadd.f32 %v752, 0.0
        %v785 = vadd.f32 %v753, 0.0
        %v786 = vadd.f32 %v754, 0.0
        %v787 = vadd.f32 %v755, 0.0
        %v788 = vadd.f32 %v756, 0.0
        %v789 = vadd.f32 %v757, 0.0
        %v790 = vadd.f32 %v758, 0.0
        %v791 = vadd.f32 %v759, 0.0
        %v792 = vadd.f32 %v760, 0.0
        %v793 = vadd.f32 %v761, 0.0
        %v794 = vadd.f32 %v762, 0.0
        %v795 = vadd.f32 %v763, 0.0
        %v796 = vadd.f32 %v764, 0.0
        %v797 = vperm.slane %v488, 1
        %v798 = vmul.f32 %v506, %v797
        %v799 = vmul.f32 %v507, %v797
        %v800 = vmul.f32 %v508, %v797
        %v801 = vmul.f32 %v509, %v797
        %v802 = vmul.f32 %v510, %v797
        %v803 = vmul.f32 %v511, %v797
        %v804 = vmul.f32 %v512, %v797
        %v805 = vmul.f32 %v513, %v797
        %v806 = vmul.f32 %v514, %v797
        %v807 = vmul.f32 %v515, %v797
        %v808 = vmul.f32 %v516, %v797
        %v809 = vmul.f32 %v517, %v797
        %v810 = vmul.f32 %v518, %v797
        %v811 = vmul.f32 %v519, %v797
        %v812 = vmul.f32 %v520, %v797
        %v813 = vmul.f32 %v521, %v797
        %v814 = vmul.f32 %v522, %v797
        %v815 = vmul.f32 %v523, %v797
        %v816 = vmul.f32 %v524, %v797
        %v817 = vmul.f32 %v525, %v797
        %v818 = vmul.f32 %v526, %v797
        %v819 = vmul.f32 %v527, %v797
        %v820 = vmul.f32 %v528, %v797
        %v821 = vmul.f32 %v529, %v797
        %v822 = vmul.f32 %v530, %v797
        %v823 = vmul.f32 %v531, %v797
        %v824 = vmul.f32 %v532, %v797
        %v825 = vmul.f32 %v533, %v797
        %v826 = vmul.f32 %v534, %v797
        %v827 = vmul.f32 %v535, %v797
        %v828 = vmul.f32 %v536, %v797
        %v829 = vmul.f32 %v537, %v797
        %v830 = vadd.f32 %v765, %v798
        %v831 = vadd.f32 %v766, %v799
        %v832 = vadd.f32 %v767, %v800
        %v833 = vadd.f32 %v768, %v801
        %v834 = vadd.f32 %v769, %v802
        %v835 = vadd.f32 %v770, %v803
        %v836 = vadd.f32 %v771, %v804
        %v837 = vadd.f32 %v772, %v805
        %v838 = vadd.f32 %v773, %v806
        %v839 = vadd.f32 %v774, %v807
        %v840 = vadd.f32 %v775, %v808
        %v841 = vadd.f32 %v776, %v809
        %v842 = vadd.f32 %v777, %v810
        %v843 = vadd.f32 %v778, %v811
        %v844 = vadd.f32 %v779, %v812
        %v845 = vadd.f32 %v780, %v813
        %v846 = vadd.f32 %v781, %v814
        %v847 = vadd.f32 %v782, %v815
        %v848 = vadd.f32 %v783, %v816
        %v849 = vadd.f32 %v784, %v817
        %v850 = vadd.f32 %v785, %v818
        %v851 = vadd.f32 %v786, %v819
        %v852 = vadd.f32 %v787, %v820
        %v853 = vadd.f32 %v788, %v821
        %v854 = vadd.f32 %v789, %v822
        %v855 = vadd.f32 %v790, %v823
        %v856 = vadd.f32 %v791, %v824
        %v857 = vadd.f32 %v792, %v825
        %v858 = vadd.f32 %v793, %v826
        %v859 = vadd.f32 %v794, %v827
        %v860 = vadd.f32 %v795, %v828
        %v861 = vadd.f32 %v796, %v829
        %v862 = vperm.slane %v488, 2
        %v863 = vmul.f32 %v700, %v862
        %v864 = vmul.f32 %v701, %v862
        %v865 = vmul.f32 %v702, %v862
        %v866 = vmul.f32 %v703, %v862
        %v867 = vmul.f32 %v704, %v862
        %v868 = vmul.f32 %v705, %v862
        %v869 = vmul.f32 %v706, %v862
        %v870 = vmul.f32 %v707, %v862
        %v871 = vmul.f32 %v708, %v862
        %v872 = vmul.f32 %v709, %v862
        %v873 = vmul.f32 %v710, %v862
        %v874 = vmul.f32 %v711, %v862
        %v875 = vmul.f32 %v712, %v862
        %v876 = vmul.f32 %v713, %v862
        %v877 = vmul.f32 %v714, %v862
        %v878 = vmul.f32 %v715, %v862
        %v879 = vmul.f32 %v716, %v862
        %v880 = vmul.f32 %v717, %v862
        %v881 = vmul.f32 %v718, %v862
        %v882 = vmul.f32 %v719, %v862
        %v883 = vmul.f32 %v720, %v862
        %v884 = vmul.f32 %v721, %v862
        %v885 = vmul.f32 %v722, %v862
        %v886 = vmul.f32 %v723, %v862
        %v887 = vmul.f32 %v724, %v862
        %v888 = vmul.f32 %v725, %v862
        %v889 = vmul.f32 %v726, %v862
        %v890 = vmul.f32 %v727, %v862
        %v891 = vmul.f32 %v728, %v862
        %v892 = vmul.f32 %v729, %v862
        %v893 = vmul.f32 %v730, %v862
        %v894 = vmul.f32 %v731, %v862
        %v895 = vadd.f32 %v830, %v863
        %v896 = vadd.f32 %v831, %v864
        %v897 = vadd.f32 %v832, %v865
        %v898 = vadd.f32 %v833, %v866
        %v899 = vadd.f32 %v834, %v867
        %v900 = vadd.f32 %v835, %v868
        %v901 = vadd.f32 %v836, %v869
        %v902 = vadd.f32 %v837, %v870
        %v903 = vadd.f32 %v838, %v871
        %v904 = vadd.f32 %v839, %v872
        %v905 = vadd.f32 %v840, %v873
        %v906 = vadd.f32 %v841, %v874
        %v907 = vadd.f32 %v842, %v875
        %v908 = vadd.f32 %v843, %v876
        %v909 = vadd.f32 %v844, %v877
        %v910 = vadd.f32 %v845, %v878
        %v911 = vadd.f32 %v846, %v879
        %v912 = vadd.f32 %v847, %v880
        %v913 = vadd.f32 %v848, %v881
        %v914 = vadd.f32 %v849, %v882
        %v915 = vadd.f32 %v850, %v883
        %v916 = vadd.f32 %v851, %v884
        %v917 = vadd.f32 %v852, %v885
        %v918 = vadd.f32 %v853, %v886
        %v919 = vadd.f32 %v854, %v887
        %v920 = vadd.f32 %v855, %v888
        %v921 = vadd.f32 %v856, %v889
        %v922 = vadd.f32 %v857, %v890
        %v923 = vadd.f32 %v858, %v891
        %v924 = vadd.f32 %v859, %v892
        %v925 = vadd.f32 %v860, %v893
        %v926 = vadd.f32 %v861, %v894
        %v927 = vunpack.c.l.bf16 %v486
        %v928 = vunpack.c.l.bf16 %v487
        %v929 = vrot.slane %v927, 7
        %v930 = vrot.slane %v928, 7
        %v931 = vsel %vm570, %v929, %v930
        %v932 = vsel %vm570, %v930, %v929
        %v933 = vmul.f32 %v932, %v498
        %v934 = vmul.f32 %v931, %v499
        %v935 = vrot.slane %v927, 1
        %v936 = vrot.slane %v928, 1
        %v937 = vsel %vm667, %v935, %v936
        %v938 = vsel %vm667, %v936, %v935
        %v939 = vmul.f32 %v937, %v504
        %v940 = vmul.f32 %v938, %v505
        %v941 = vperm.slane %v489, 0
        %v942 = vmul.f32 %v605, %v941
        %v943 = vmul.f32 %v606, %v941
        %v944 = vmul.f32 %v607, %v941
        %v945 = vmul.f32 %v608, %v941
        %v946 = vmul.f32 %v609, %v941
        %v947 = vmul.f32 %v610, %v941
        %v948 = vmul.f32 %v611, %v941
        %v949 = vmul.f32 %v612, %v941
        %v950 = vmul.f32 %v613, %v941
        %v951 = vmul.f32 %v614, %v941
        %v952 = vmul.f32 %v615, %v941
        %v953 = vmul.f32 %v616, %v941
        %v954 = vmul.f32 %v617, %v941
        %v955 = vmul.f32 %v618, %v941
        %v956 = vmul.f32 %v619, %v941
        %v957 = vmul.f32 %v620, %v941
        %v958 = vmul.f32 %v621, %v941
        %v959 = vmul.f32 %v622, %v941
        %v960 = vmul.f32 %v623, %v941
        %v961 = vmul.f32 %v624, %v941
        %v962 = vmul.f32 %v625, %v941
        %v963 = vmul.f32 %v626, %v941
        %v964 = vmul.f32 %v627, %v941
        %v965 = vmul.f32 %v628, %v941
        %v966 = vmul.f32 %v629, %v941
        %v967 = vmul.f32 %v630, %v941
        %v968 = vmul.f32 %v631, %v941
        %v969 = vmul.f32 %v632, %v941
        %v970 = vmul.f32 %v633, %v941
        %v971 = vmul.f32 %v634, %v941
        %v972 = vmul.f32 %v933, %v941
        %v973 = vmul.f32 %v934, %v941
        %v974 = vadd.f32 %v895, %v942
        %v975 = vadd.f32 %v896, %v943
        %v976 = vadd.f32 %v897, %v944
        %v977 = vadd.f32 %v898, %v945
        %v978 = vadd.f32 %v899, %v946
        %v979 = vadd.f32 %v900, %v947
        %v980 = vadd.f32 %v901, %v948
        %v981 = vadd.f32 %v902, %v949
        %v982 = vadd.f32 %v903, %v950
        %v983 = vadd.f32 %v904, %v951
        %v984 = vadd.f32 %v905, %v952
        %v985 = vadd.f32 %v906, %v953
        %v986 = vadd.f32 %v907, %v954
        %v987 = vadd.f32 %v908, %v955
        %v988 = vadd.f32 %v909, %v956
        %v989 = vadd.f32 %v910, %v957
        %v990 = vadd.f32 %v911, %v958
        %v991 = vadd.f32 %v912, %v959
        %v992 = vadd.f32 %v913, %v960
        %v993 = vadd.f32 %v914, %v961
        %v994 = vadd.f32 %v915, %v962
        %v995 = vadd.f32 %v916, %v963
        %v996 = vadd.f32 %v917, %v964
        %v997 = vadd.f32 %v918, %v965
        %v998 = vadd.f32 %v919, %v966
        %v999 = vadd.f32 %v920, %v967
        %v1000 = vadd.f32 %v921, %v968
        %v1001 = vadd.f32 %v922, %v969
        %v1002 = vadd.f32 %v923, %v970
        %v1003 = vadd.f32 %v924, %v971
        %v1004 = vadd.f32 %v925, %v972
        %v1005 = vadd.f32 %v926, %v973
        %v1006 = vperm.slane %v489, 1
        %v1007 = vmul.f32 %v508, %v1006
        %v1008 = vmul.f32 %v509, %v1006
        %v1009 = vmul.f32 %v510, %v1006
        %v1010 = vmul.f32 %v511, %v1006
        %v1011 = vmul.f32 %v512, %v1006
        %v1012 = vmul.f32 %v513, %v1006
        %v1013 = vmul.f32 %v514, %v1006
        %v1014 = vmul.f32 %v515, %v1006
        %v1015 = vmul.f32 %v516, %v1006
        %v1016 = vmul.f32 %v517, %v1006
        %v1017 = vmul.f32 %v518, %v1006
        %v1018 = vmul.f32 %v519, %v1006
        %v1019 = vmul.f32 %v520, %v1006
        %v1020 = vmul.f32 %v521, %v1006
        %v1021 = vmul.f32 %v522, %v1006
        %v1022 = vmul.f32 %v523, %v1006
        %v1023 = vmul.f32 %v524, %v1006
        %v1024 = vmul.f32 %v525, %v1006
        %v1025 = vmul.f32 %v526, %v1006
        %v1026 = vmul.f32 %v527, %v1006
        %v1027 = vmul.f32 %v528, %v1006
        %v1028 = vmul.f32 %v529, %v1006
        %v1029 = vmul.f32 %v530, %v1006
        %v1030 = vmul.f32 %v531, %v1006
        %v1031 = vmul.f32 %v532, %v1006
        %v1032 = vmul.f32 %v533, %v1006
        %v1033 = vmul.f32 %v534, %v1006
        %v1034 = vmul.f32 %v535, %v1006
        %v1035 = vmul.f32 %v536, %v1006
        %v1036 = vmul.f32 %v537, %v1006
        %v1037 = vmul.f32 %v927, %v1006
        %v1038 = vmul.f32 %v928, %v1006
        %v1039 = vadd.f32 %v974, %v1007
        %v1040 = vadd.f32 %v975, %v1008
        %v1041 = vadd.f32 %v976, %v1009
        %v1042 = vadd.f32 %v977, %v1010
        %v1043 = vadd.f32 %v978, %v1011
        %v1044 = vadd.f32 %v979, %v1012
        %v1045 = vadd.f32 %v980, %v1013
        %v1046 = vadd.f32 %v981, %v1014
        %v1047 = vadd.f32 %v982, %v1015
        %v1048 = vadd.f32 %v983, %v1016
        %v1049 = vadd.f32 %v984, %v1017
        %v1050 = vadd.f32 %v985, %v1018
        %v1051 = vadd.f32 %v986, %v1019
        %v1052 = vadd.f32 %v987, %v1020
        %v1053 = vadd.f32 %v988, %v1021
        %v1054 = vadd.f32 %v989, %v1022
        %v1055 = vadd.f32 %v990, %v1023
        %v1056 = vadd.f32 %v991, %v1024
        %v1057 = vadd.f32 %v992, %v1025
        %v1058 = vadd.f32 %v993, %v1026
        %v1059 = vadd.f32 %v994, %v1027
        %v1060 = vadd.f32 %v995, %v1028
        %v1061 = vadd.f32 %v996, %v1029
        %v1062 = vadd.f32 %v997, %v1030
        %v1063 = vadd.f32 %v998, %v1031
        %v1064 = vadd.f32 %v999, %v1032
        %v1065 = vadd.f32 %v1000, %v1033
        %v1066 = vadd.f32 %v1001, %v1034
        %v1067 = vadd.f32 %v1002, %v1035
        %v1068 = vadd.f32 %v1003, %v1036
        %v1069 = vadd.f32 %v1004, %v1037
        %v1070 = vadd.f32 %v1005, %v1038
        %v1071 = vperm.slane %v489, 2
        %v1072 = vmul.f32 %v702, %v1071
        %v1073 = vmul.f32 %v703, %v1071
        %v1074 = vmul.f32 %v704, %v1071
        %v1075 = vmul.f32 %v705, %v1071
        %v1076 = vmul.f32 %v706, %v1071
        %v1077 = vmul.f32 %v707, %v1071
        %v1078 = vmul.f32 %v708, %v1071
        %v1079 = vmul.f32 %v709, %v1071
        %v1080 = vmul.f32 %v710, %v1071
        %v1081 = vmul.f32 %v711, %v1071
        %v1082 = vmul.f32 %v712, %v1071
        %v1083 = vmul.f32 %v713, %v1071
        %v1084 = vmul.f32 %v714, %v1071
        %v1085 = vmul.f32 %v715, %v1071
        %v1086 = vmul.f32 %v716, %v1071
        %v1087 = vmul.f32 %v717, %v1071
        %v1088 = vmul.f32 %v718, %v1071
        %v1089 = vmul.f32 %v719, %v1071
        %v1090 = vmul.f32 %v720, %v1071
        %v1091 = vmul.f32 %v721, %v1071
        %v1092 = vmul.f32 %v722, %v1071
        %v1093 = vmul.f32 %v723, %v1071
        %v1094 = vmul.f32 %v724, %v1071
        %v1095 = vmul.f32 %v725, %v1071
        %v1096 = vmul.f32 %v726, %v1071
        %v1097 = vmul.f32 %v727, %v1071
        %v1098 = vmul.f32 %v728, %v1071
        %v1099 = vmul.f32 %v729, %v1071
        %v1100 = vmul.f32 %v730, %v1071
        %v1101 = vmul.f32 %v731, %v1071
        %v1102 = vmul.f32 %v939, %v1071
        %v1103 = vmul.f32 %v940, %v1071
        %v1104 = vadd.f32 %v1039, %v1072
        %v1105 = vadd.f32 %v1040, %v1073
        %v1106 = vadd.f32 %v1041, %v1074
        %v1107 = vadd.f32 %v1042, %v1075
        %v1108 = vadd.f32 %v1043, %v1076
        %v1109 = vadd.f32 %v1044, %v1077
        %v1110 = vadd.f32 %v1045, %v1078
        %v1111 = vadd.f32 %v1046, %v1079
        %v1112 = vadd.f32 %v1047, %v1080
        %v1113 = vadd.f32 %v1048, %v1081
        %v1114 = vadd.f32 %v1049, %v1082
        %v1115 = vadd.f32 %v1050, %v1083
        %v1116 = vadd.f32 %v1051, %v1084
        %v1117 = vadd.f32 %v1052, %v1085
        %v1118 = vadd.f32 %v1053, %v1086
        %v1119 = vadd.f32 %v1054, %v1087
        %v1120 = vadd.f32 %v1055, %v1088
        %v1121 = vadd.f32 %v1056, %v1089
        %v1122 = vadd.f32 %v1057, %v1090
        %v1123 = vadd.f32 %v1058, %v1091
        %v1124 = vadd.f32 %v1059, %v1092
        %v1125 = vadd.f32 %v1060, %v1093
        %v1126 = vadd.f32 %v1061, %v1094
        %v1127 = vadd.f32 %v1062, %v1095
        %v1128 = vadd.f32 %v1063, %v1096
        %v1129 = vadd.f32 %v1064, %v1097
        %v1130 = vadd.f32 %v1065, %v1098
        %v1131 = vadd.f32 %v1066, %v1099
        %v1132 = vadd.f32 %v1067, %v1100
        %v1133 = vadd.f32 %v1068, %v1101
        %v1134 = vadd.f32 %v1069, %v1102
        %v1135 = vadd.f32 %v1070, %v1103
        %v1136 = vunpack.c.l.bf16 %v454
        %v1137 = vunpack.c.l.bf16 %v455
        %v1138 = vrot.slane %v1136, 7
        %v1139 = vrot.slane %v1137, 7
        %v1140 = vsel %vm570, %v1138, %v1139
        %v1141 = vsel %vm570, %v1139, %v1138
        %v1142 = vmul.f32 %v1141, %v498
        %v1143 = vmul.f32 %v1140, %v499
        %v1144 = vrot.slane %v1136, 1
        %v1145 = vrot.slane %v1137, 1
        %v1146 = vsel %vm667, %v1144, %v1145
        %v1147 = vsel %vm667, %v1145, %v1144
        %v1148 = vmul.f32 %v1146, %v504
        %v1149 = vmul.f32 %v1147, %v505
        %v1150 = vperm.slane %v490, 0
        %v1151 = vmul.f32 %v607, %v1150
        %v1152 = vmul.f32 %v608, %v1150
        %v1153 = vmul.f32 %v609, %v1150
        %v1154 = vmul.f32 %v610, %v1150
        %v1155 = vmul.f32 %v611, %v1150
        %v1156 = vmul.f32 %v612, %v1150
        %v1157 = vmul.f32 %v613, %v1150
        %v1158 = vmul.f32 %v614, %v1150
        %v1159 = vmul.f32 %v615, %v1150
        %v1160 = vmul.f32 %v616, %v1150
        %v1161 = vmul.f32 %v617, %v1150
        %v1162 = vmul.f32 %v618, %v1150
        %v1163 = vmul.f32 %v619, %v1150
        %v1164 = vmul.f32 %v620, %v1150
        %v1165 = vmul.f32 %v621, %v1150
        %v1166 = vmul.f32 %v622, %v1150
        %v1167 = vmul.f32 %v623, %v1150
        %v1168 = vmul.f32 %v624, %v1150
        %v1169 = vmul.f32 %v625, %v1150
        %v1170 = vmul.f32 %v626, %v1150
        %v1171 = vmul.f32 %v627, %v1150
        %v1172 = vmul.f32 %v628, %v1150
        %v1173 = vmul.f32 %v629, %v1150
        %v1174 = vmul.f32 %v630, %v1150
        %v1175 = vmul.f32 %v631, %v1150
        %v1176 = vmul.f32 %v632, %v1150
        %v1177 = vmul.f32 %v633, %v1150
        %v1178 = vmul.f32 %v634, %v1150
        %v1179 = vmul.f32 %v933, %v1150
        %v1180 = vmul.f32 %v934, %v1150
        %v1181 = vmul.f32 %v1142, %v1150
        %v1182 = vmul.f32 %v1143, %v1150
        %v1183 = vadd.f32 %v1104, %v1151
        %v1184 = vadd.f32 %v1105, %v1152
        %v1185 = vadd.f32 %v1106, %v1153
        %v1186 = vadd.f32 %v1107, %v1154
        %v1187 = vadd.f32 %v1108, %v1155
        %v1188 = vadd.f32 %v1109, %v1156
        %v1189 = vadd.f32 %v1110, %v1157
        %v1190 = vadd.f32 %v1111, %v1158
        %v1191 = vadd.f32 %v1112, %v1159
        %v1192 = vadd.f32 %v1113, %v1160
        %v1193 = vadd.f32 %v1114, %v1161
        %v1194 = vadd.f32 %v1115, %v1162
        %v1195 = vadd.f32 %v1116, %v1163
        %v1196 = vadd.f32 %v1117, %v1164
        %v1197 = vadd.f32 %v1118, %v1165
        %v1198 = vadd.f32 %v1119, %v1166
        %v1199 = vadd.f32 %v1120, %v1167
        %v1200 = vadd.f32 %v1121, %v1168
        %v1201 = vadd.f32 %v1122, %v1169
        %v1202 = vadd.f32 %v1123, %v1170
        %v1203 = vadd.f32 %v1124, %v1171
        %v1204 = vadd.f32 %v1125, %v1172
        %v1205 = vadd.f32 %v1126, %v1173
        %v1206 = vadd.f32 %v1127, %v1174
        %v1207 = vadd.f32 %v1128, %v1175
        %v1208 = vadd.f32 %v1129, %v1176
        %v1209 = vadd.f32 %v1130, %v1177
        %v1210 = vadd.f32 %v1131, %v1178
        %v1211 = vadd.f32 %v1132, %v1179
        %v1212 = vadd.f32 %v1133, %v1180
        %v1213 = vadd.f32 %v1134, %v1181
        %v1214 = vadd.f32 %v1135, %v1182
        %v1215 = vperm.slane %v490, 1
        %v1216 = vmul.f32 %v510, %v1215
        %v1217 = vmul.f32 %v511, %v1215
        %v1218 = vmul.f32 %v512, %v1215
        %v1219 = vmul.f32 %v513, %v1215
        %v1220 = vmul.f32 %v514, %v1215
        %v1221 = vmul.f32 %v515, %v1215
        %v1222 = vmul.f32 %v516, %v1215
        %v1223 = vmul.f32 %v517, %v1215
        %v1224 = vmul.f32 %v518, %v1215
        %v1225 = vmul.f32 %v519, %v1215
        %v1226 = vmul.f32 %v520, %v1215
        %v1227 = vmul.f32 %v521, %v1215
        %v1228 = vmul.f32 %v522, %v1215
        %v1229 = vmul.f32 %v523, %v1215
        %v1230 = vmul.f32 %v524, %v1215
        %v1231 = vmul.f32 %v525, %v1215
        %v1232 = vmul.f32 %v526, %v1215
        %v1233 = vmul.f32 %v527, %v1215
        %v1234 = vmul.f32 %v528, %v1215
        %v1235 = vmul.f32 %v529, %v1215
        %v1236 = vmul.f32 %v530, %v1215
        %v1237 = vmul.f32 %v531, %v1215
        %v1238 = vmul.f32 %v532, %v1215
        %v1239 = vmul.f32 %v533, %v1215
        %v1240 = vmul.f32 %v534, %v1215
        %v1241 = vmul.f32 %v535, %v1215
        %v1242 = vmul.f32 %v536, %v1215
        %v1243 = vmul.f32 %v537, %v1215
        %v1244 = vmul.f32 %v927, %v1215
        %v1245 = vmul.f32 %v928, %v1215
        %v1246 = vmul.f32 %v1136, %v1215
        %v1247 = vmul.f32 %v1137, %v1215
        %v1248 = vadd.f32 %v1183, %v1216
        %v1249 = vadd.f32 %v1184, %v1217
        %v1250 = vadd.f32 %v1185, %v1218
        %v1251 = vadd.f32 %v1186, %v1219
        %v1252 = vadd.f32 %v1187, %v1220
        %v1253 = vadd.f32 %v1188, %v1221
        %v1254 = vadd.f32 %v1189, %v1222
        %v1255 = vadd.f32 %v1190, %v1223
        %v1256 = vadd.f32 %v1191, %v1224
        %v1257 = vadd.f32 %v1192, %v1225
        %v1258 = vadd.f32 %v1193, %v1226
        %v1259 = vadd.f32 %v1194, %v1227
        %v1260 = vadd.f32 %v1195, %v1228
        %v1261 = vadd.f32 %v1196, %v1229
        %v1262 = vadd.f32 %v1197, %v1230
        %v1263 = vadd.f32 %v1198, %v1231
        %v1264 = vadd.f32 %v1199, %v1232
        %v1265 = vadd.f32 %v1200, %v1233
        %v1266 = vadd.f32 %v1201, %v1234
        %v1267 = vadd.f32 %v1202, %v1235
        %v1268 = vadd.f32 %v1203, %v1236
        %v1269 = vadd.f32 %v1204, %v1237
        %v1270 = vadd.f32 %v1205, %v1238
        %v1271 = vadd.f32 %v1206, %v1239
        %v1272 = vadd.f32 %v1207, %v1240
        %v1273 = vadd.f32 %v1208, %v1241
        %v1274 = vadd.f32 %v1209, %v1242
        %v1275 = vadd.f32 %v1210, %v1243
        %v1276 = vadd.f32 %v1211, %v1244
        %v1277 = vadd.f32 %v1212, %v1245
        %v1278 = vadd.f32 %v1213, %v1246
        %v1279 = vadd.f32 %v1214, %v1247
        %v1280 = vperm.slane %v490, 2
        %v1281 = vmul.f32 %v704, %v1280
        %v1282 = vmul.f32 %v705, %v1280
        %v1283 = vmul.f32 %v706, %v1280
        %v1284 = vmul.f32 %v707, %v1280
        %v1285 = vmul.f32 %v708, %v1280
        %v1286 = vmul.f32 %v709, %v1280
        %v1287 = vmul.f32 %v710, %v1280
        %v1288 = vmul.f32 %v711, %v1280
        %v1289 = vmul.f32 %v712, %v1280
        %v1290 = vmul.f32 %v713, %v1280
        %v1291 = vmul.f32 %v714, %v1280
        %v1292 = vmul.f32 %v715, %v1280
        %v1293 = vmul.f32 %v716, %v1280
        %v1294 = vmul.f32 %v717, %v1280
        %v1295 = vmul.f32 %v718, %v1280
        %v1296 = vmul.f32 %v719, %v1280
        %v1297 = vmul.f32 %v720, %v1280
        %v1298 = vmul.f32 %v721, %v1280
        %v1299 = vmul.f32 %v722, %v1280
        %v1300 = vmul.f32 %v723, %v1280
        %v1301 = vmul.f32 %v724, %v1280
        %v1302 = vmul.f32 %v725, %v1280
        %v1303 = vmul.f32 %v726, %v1280
        %v1304 = vmul.f32 %v727, %v1280
        %v1305 = vmul.f32 %v728, %v1280
        %v1306 = vmul.f32 %v729, %v1280
        %v1307 = vmul.f32 %v730, %v1280
        %v1308 = vmul.f32 %v731, %v1280
        %v1309 = vmul.f32 %v939, %v1280
        %v1310 = vmul.f32 %v940, %v1280
        %v1311 = vmul.f32 %v1148, %v1280
        %v1312 = vmul.f32 %v1149, %v1280
        %v1313 = vadd.f32 %v1248, %v1281
        %v1314 = vadd.f32 %v1249, %v1282
        %v1315 = vadd.f32 %v1250, %v1283
        %v1316 = vadd.f32 %v1251, %v1284
        %v1317 = vadd.f32 %v1252, %v1285
        %v1318 = vadd.f32 %v1253, %v1286
        %v1319 = vadd.f32 %v1254, %v1287
        %v1320 = vadd.f32 %v1255, %v1288
        %v1321 = vadd.f32 %v1256, %v1289
        %v1322 = vadd.f32 %v1257, %v1290
        %v1323 = vadd.f32 %v1258, %v1291
        %v1324 = vadd.f32 %v1259, %v1292
        %v1325 = vadd.f32 %v1260, %v1293
        %v1326 = vadd.f32 %v1261, %v1294
        %v1327 = vadd.f32 %v1262, %v1295
        %v1328 = vadd.f32 %v1263, %v1296
        %v1329 = vadd.f32 %v1264, %v1297
        %v1330 = vadd.f32 %v1265, %v1298
        %v1331 = vadd.f32 %v1266, %v1299
        %v1332 = vadd.f32 %v1267, %v1300
        %v1333 = vadd.f32 %v1268, %v1301
        %v1334 = vadd.f32 %v1269, %v1302
        %v1335 = vadd.f32 %v1270, %v1303
        %v1336 = vadd.f32 %v1271, %v1304
        %v1337 = vadd.f32 %v1272, %v1305
        %v1338 = vadd.f32 %v1273, %v1306
        %v1339 = vadd.f32 %v1274, %v1307
        %v1340 = vadd.f32 %v1275, %v1308
        %v1341 = vadd.f32 %v1276, %v1309
        %v1342 = vadd.f32 %v1277, %v1310
        %v1343 = vadd.f32 %v1278, %v1311
        %v1344 = vadd.f32 %v1279, %v1312
        %v1345 = vld [vmem:[%s4] sm:$0x1]
        %v1347 = vperm.slane %v1345, 0
        %v1349 = vadd.f32 %v1313, %v1347
        %v1350 = vadd.f32 %v1314, %v1347
        %v1351 = vadd.f32 %v1315, %v1347
        %v1352 = vadd.f32 %v1316, %v1347
        %v1353 = vadd.f32 %v1317, %v1347
        %v1354 = vadd.f32 %v1318, %v1347
        %v1355 = vadd.f32 %v1319, %v1347
        %v1356 = vadd.f32 %v1320, %v1347
        %v1357 = vadd.f32 %v1321, %v1347
        %v1358 = vadd.f32 %v1322, %v1347
        %v1359 = vadd.f32 %v1323, %v1347
        %v1360 = vadd.f32 %v1324, %v1347
        %v1361 = vadd.f32 %v1325, %v1347
        %v1362 = vadd.f32 %v1326, %v1347
        %v1363 = vadd.f32 %v1327, %v1347
        %v1364 = vadd.f32 %v1328, %v1347
        %v1365 = vadd.f32 %v1329, %v1347
        %v1366 = vadd.f32 %v1330, %v1347
        %v1367 = vadd.f32 %v1331, %v1347
        %v1368 = vadd.f32 %v1332, %v1347
        %v1369 = vadd.f32 %v1333, %v1347
        %v1370 = vadd.f32 %v1334, %v1347
        %v1371 = vadd.f32 %v1335, %v1347
        %v1372 = vadd.f32 %v1336, %v1347
        %v1373 = vadd.f32 %v1337, %v1347
        %v1374 = vadd.f32 %v1338, %v1347
        %v1375 = vadd.f32 %v1339, %v1347
        %v1376 = vadd.f32 %v1340, %v1347
        %v1377 = vadd.f32 %v1341, %v1347
        %v1378 = vadd.f32 %v1342, %v1347
        %v1379 = vadd.f32 %v1343, %v1347
        %v1380 = vadd.f32 %v1344, %v1347
        %v1381 = vpack.c.bf16 %v1349, %v1349
        %v1382 = vpack.c.bf16 %v1350, %v1350
        %v1383 = vpack.c.bf16 %v1351, %v1351
        %v1384 = vpack.c.bf16 %v1352, %v1352
        %v1385 = vpack.c.bf16 %v1353, %v1353
        %v1386 = vpack.c.bf16 %v1354, %v1354
        %v1387 = vpack.c.bf16 %v1355, %v1355
        %v1388 = vpack.c.bf16 %v1356, %v1356
        %v1389 = vpack.c.bf16 %v1357, %v1357
        %v1390 = vpack.c.bf16 %v1358, %v1358
        %v1391 = vpack.c.bf16 %v1359, %v1359
        %v1392 = vpack.c.bf16 %v1360, %v1360
        %v1393 = vpack.c.bf16 %v1361, %v1361
        %v1394 = vpack.c.bf16 %v1362, %v1362
        %v1395 = vpack.c.bf16 %v1363, %v1363
        %v1396 = vpack.c.bf16 %v1364, %v1364
        %v1397 = vpack.c.bf16 %v1365, %v1365
        %v1398 = vpack.c.bf16 %v1366, %v1366
        %v1399 = vpack.c.bf16 %v1367, %v1367
        %v1400 = vpack.c.bf16 %v1368, %v1368
        %v1401 = vpack.c.bf16 %v1369, %v1369
        %v1402 = vpack.c.bf16 %v1370, %v1370
        %v1403 = vpack.c.bf16 %v1371, %v1371
        %v1404 = vpack.c.bf16 %v1372, %v1372
        %v1405 = vpack.c.bf16 %v1373, %v1373
        %v1406 = vpack.c.bf16 %v1374, %v1374
        %v1407 = vpack.c.bf16 %v1375, %v1375
        %v1408 = vpack.c.bf16 %v1376, %v1376
        %v1409 = vpack.c.bf16 %v1377, %v1377
        %v1410 = vpack.c.bf16 %v1378, %v1378
        %v1411 = vpack.c.bf16 %v1379, %v1379
        %v1412 = vpack.c.bf16 %v1380, %v1380
        %vm1413 = vcmask 125952
        %1414 = vst.msk [vmem:[%s393] sm:$0xf] %vm1413, %v1381
        %1415 = vst.msk [vmem:[%s393 + $0x4] sm:$0xf] %vm1413, %v1382
        %1416 = vst.msk [vmem:[%s393 + $0x8] sm:$0xf] %vm1413, %v1383
        %1417 = vst.msk [vmem:[%s393 + $0xc] sm:$0xf] %vm1413, %v1384
        %1418 = vst.msk [vmem:[%s393 + $0x10] sm:$0xf] %vm1413, %v1385
        %1419 = vst.msk [vmem:[%s393 + $0x14] sm:$0xf] %vm1413, %v1386
        %1420 = vst.msk [vmem:[%s393 + $0x18] sm:$0xf] %vm1413, %v1387
        %1421 = vst.msk [vmem:[%s393 + $0x1c] sm:$0xf] %vm1413, %v1388
        %1422 = vst.msk [vmem:[%s393 + $0x20] sm:$0xf] %vm1413, %v1389
        %1423 = vst.msk [vmem:[%s393 + $0x24] sm:$0xf] %vm1413, %v1390
        %1424 = vst.msk [vmem:[%s393 + $0x28] sm:$0xf] %vm1413, %v1391
        %1425 = vst.msk [vmem:[%s393 + $0x2c] sm:$0xf] %vm1413, %v1392
        %1426 = vst.msk [vmem:[%s393 + $0x30] sm:$0xf] %vm1413, %v1393
        %1427 = vst.msk [vmem:[%s393 + $0x34] sm:$0xf] %vm1413, %v1394
        %1428 = vst.msk [vmem:[%s393 + $0x38] sm:$0xf] %vm1413, %v1395
        %1429 = vst.msk [vmem:[%s393 + $0x3c] sm:$0xf] %vm1413, %v1396
        %1430 = vst.msk [vmem:[%s393 + $0x40] sm:$0xf] %vm1413, %v1397
        %1431 = vst.msk [vmem:[%s393 + $0x44] sm:$0xf] %vm1413, %v1398
        %1432 = vst.msk [vmem:[%s393 + $0x48] sm:$0xf] %vm1413, %v1399
        %1433 = vst.msk [vmem:[%s393 + $0x4c] sm:$0xf] %vm1413, %v1400
        %1434 = vst.msk [vmem:[%s393 + $0x50] sm:$0xf] %vm1413, %v1401
        %1435 = vst.msk [vmem:[%s393 + $0x54] sm:$0xf] %vm1413, %v1402
        %1436 = vst.msk [vmem:[%s393 + $0x58] sm:$0xf] %vm1413, %v1403
        %1437 = vst.msk [vmem:[%s393 + $0x5c] sm:$0xf] %vm1413, %v1404
        %1438 = vst.msk [vmem:[%s393 + $0x60] sm:$0xf] %vm1413, %v1405
        %1439 = vst.msk [vmem:[%s393 + $0x64] sm:$0xf] %vm1413, %v1406
        %1440 = vst.msk [vmem:[%s393 + $0x68] sm:$0xf] %vm1413, %v1407
        %1441 = vst.msk [vmem:[%s393 + $0x6c] sm:$0xf] %vm1413, %v1408
        %1442 = vst.msk [vmem:[%s393 + $0x70] sm:$0xf] %vm1413, %v1409
        %1443 = vst.msk [vmem:[%s393 + $0x74] sm:$0xf] %vm1413, %v1410
        %1444 = vst.msk [vmem:[%s393 + $0x78] sm:$0xf] %vm1413, %v1411
        %1445 = vst.msk [vmem:[%s393 + $0x7c] sm:$0xf] %vm1413, %v1412
        %s1446 = sand.u32 %s190, 1
        %s1447 = scalar_lea.sflag [#allocation4], %s1446
        %s1448 = sand.u32 %s190, 1
        %s1449 = smul.addr %s1448, 128
        %s1450 = scalar_lea.vmem [#allocation10], %s1449
        // Predicated region
        $region57: #{tpu_custom_call.1} parent=39 // pred_check
          %p1451 = pneg %p200
        $region58: #{tpu_custom_call.1} parent=39 // pred_check_branch
          %1453 = sbr.rel (%p1451) target = $region60
        $region59: #{tpu_custom_call.1} parent=39 // pred_region
          %s1454 = smul.u32 16, %s31
          %1456 = vsyncadd %s1447, 0
          %s1457 = smul.addr %s1454, 2
          %s1458 = smul.addr %s30, 32
          %s1459 = sadd.s32 %s1457, %s1458
          %s1460 = smul.addr %s1459, 4
          %s1461 = scalar_lea.hbm %s5, %s1460
          %s1462 = sshll.u32 %s1450, 4
          %s1463 = int_to_ptr.vmem [resolvable:$true] %s1462
          %s1464 = sshll.u32 %s1461, 4
          %s1465 = int_to_ptr.hbm [resolvable:$true] %s1464
          %1470 = dma.vmem_to_hbm [thread:$0]  %s1463, 2048, %s1465, %s1447, 64, 64, 4
        $region60: #{tpu_custom_call.1} parent=39 // pred_fallthru
          _
      $region40: #{tpu_custom_call.1} parent=5 // pred_fallthru
        _
      %p1471 = scmp.le.s32.totalorder 2, %s21
      // Predicated region
      $region61: #{tpu_custom_call.1} parent=5 // pred_check
        %p1472 = pneg %p1471
      $region62: #{tpu_custom_call.1} parent=5 // pred_check_branch
        %1474 = sbr.rel (%p1472) target = $region64
      $region63: #{tpu_custom_call.1} parent=5 // pred_region
        %s1475 = ssub.s32 %s21, 2
        // Predicated region
        $region65: #{tpu_custom_call.1} parent=63 // pred_check
          %p1476 = pneg %p206
        $region66: #{tpu_custom_call.1} parent=63 // pred_check_branch
          %1478 = sbr.rel (%p1476) target = $region68
        $region67: #{tpu_custom_call.1} parent=63 // pred_region
          %s1479 = sand.u32 %s191, 1
          %s1480 = scalar_lea.sflag [#allocation4], %s1479
          %s1481 = sand.u32 %s191, 1
          %s1482 = smul.addr %s1481, 128
          %s1483 = scalar_lea.vmem [#allocation10], %s1482
          %1485 = dma.done %s1480, 2048
        $region68: #{tpu_custom_call.1} parent=63 // pred_fallthru
          _
      $region64: #{tpu_custom_call.1} parent=5 // pred_fallthru
        _
    $region6: #{tpu_custom_call.1} parent=1 // loop_footer
      %s25 = sadd.s32 1, %s21
    $region7: #{tpu_custom_call.1} parent=1 // loop_footer_branch
      %20 = sbr.rel target = $region3
    $region8: #{tpu_custom_call.1} parent=1 // loop_exit
      _
    %1486 = vsyncpa [#allocation3], 1
    %s1487 = scalar_lea.sflag [#allocation3], 1
    %1488 = vsyncpa %s1487, 1
    %1489 = vsyncpa [#allocation6], 1
    %s1490 = scalar_lea.sflag [#allocation6], 1
    %1491 = vsyncpa %s1490, 1
    %1492 = vsyncpa [#allocation9], 1
    %1493 = vsyncpa [#allocation4], 1
    %s1494 = scalar_lea.sflag [#allocation4], 1
    %1495 = vsyncpa %s1494, 1

</llo_original>
